<compile_context>
chip_gen: v6e
topology: v6e:2x2x1
jax: 0.10.0
libtpu: 0.0.40
codegen_flags: <defaults>
</compile_context>

<pallas_src>
import functools

import jax
import jax.numpy as jnp
from jax import lax
from jax.experimental import pallas as pl
from jax.experimental.pallas import tpu as pltpu

STATE_DIM = 20
NUM_FEATURES = 4          # e_len, coord_difference, dot_coord, dot_diff
IN_DIM = STATE_DIM + NUM_FEATURES   # 24
HIDDEN = 40
MID = 150
MID_PAD = 256             # 150 -> 2 full 128-lane tiles (unmasked layout)
OUT_DIM = 4
NUM_ROUNDS = 3
EPS = 1e-5
BN_EPS = 1e-5
TILE_E_DEFAULT = 512      # >=512 edge rows amortizes per-grid-step overhead


def _round_up(x, m):
    return ((x + m - 1) // m) * m


def _vmem_bytes(shape):
    """Rough f32 VMEM footprint of a buffer after (8,128) tiling."""
    lead = 1
    for d in shape[:-2]:
        lead *= int(d)
    return 4 * lead * _round_up(int(shape[-2]), 8) * _round_up(int(shape[-1]), 128)


def _softplus(z):
    # numerically-stable softplus (matches torch.nn.Softplus, beta=1)
    return jnp.log1p(jnp.exp(-jnp.abs(z))) + jnp.maximum(z, 0.0)


def gnn_kernel(nfrom_ref, nto_ref, gidx_ref,                      # SMEM prefetch
               edge_term_ref, w1_ref, w2_ref, b2_ref, w3_ref, b3_ref,
               w4_ref, b4_ref, wo_ref, bo_ref,                    # VMEM inputs
               out_ref,                                           # VMEM output
               prev_ref, next_ref, gath_ref, msg_ref, pool_ref):  # VMEM scratch
    r = pl.program_id(0)           # message-passing round
    t = pl.program_id(1)           # edge tile
    last_r = pl.num_programs(0) - 1
    last_t = pl.num_programs(1) - 1
    tile_e = gath_ref.shape[0]
    base = t * tile_e

    # ---- init node state (both buffers) once ----
    @pl.when(jnp.logical_and(r == 0, t == 0))
    def _init():
        prev_ref[...] = jnp.zeros_like(prev_ref)
        next_ref[...] = jnp.zeros_like(next_ref)

    # ---- gather state[node_from] for this edge tile ----
    @pl.when(r == 0)
    def _zero_gather():
        # round 0 gathers an all-zero state; skip the per-edge loop entirely.
        gath_ref[...] = jnp.zeros_like(gath_ref)

    @pl.when(r > 0)
    def _gather():
        def body(e, carry):
            src = nfrom_ref[base + e]
            gath_ref[pl.ds(e, 1), :] = prev_ref[pl.ds(src, 1), :]
            return carry
        lax.fori_loop(0, tile_e, body, 0)

    # ---- message MLP (BatchNorm folded into w1 / edge_term on host) ----
    h = jnp.tanh(jnp.dot(gath_ref[...], w1_ref[...],
                         preferred_element_type=jnp.float32) + edge_term_ref[...])
    h = jnp.tanh(jnp.dot(h, w2_ref[...],
                         preferred_element_type=jnp.float32) + b2_ref[...])
    h = jnp.tanh(jnp.dot(h, w3_ref[...],
                         preferred_element_type=jnp.float32) + b3_ref[...])
    msg_ref[...] = jnp.tanh(jnp.dot(h, w4_ref[...],
                                    preferred_element_type=jnp.float32) + b4_ref[...])

    # ---- scatter-add messages into state[node_to] (padded edges go to dummy row) ----
    def sbody(e, carry):
        dst = nto_ref[base + e]
        next_ref[pl.ds(dst, 1), :] = (next_ref[pl.ds(dst, 1), :]
                                      + msg_ref[pl.ds(e, 1), :])
        return carry
    lax.fori_loop(0, tile_e, sbody, 0)

    # ---- end of round: publish post-round state for next round's gathers ----
    @pl.when(t == last_t)
    def _publish():
        prev_ref[...] = next_ref[...]

    # ---- final step: graph pooling + output head ----
    @pl.when(jnp.logical_and(r == last_r, t == last_t))
    def _finalize():
        pool_ref[...] = jnp.zeros_like(pool_ref)
        n_nodes = gidx_ref.shape[0]

        def pbody(n, carry):
            g = gidx_ref[n]
            pool_ref[pl.ds(g, 1), :] = (pool_ref[pl.ds(g, 1), :]
                                        + next_ref[pl.ds(n, 1), :])
            return carry
        lax.fori_loop(0, n_nodes, pbody, 0)

        ev = (jnp.dot(pool_ref[...], wo_ref[...],
                      preferred_element_type=jnp.float32) + bo_ref[...])   # (G, 4)
        sp = _softplus(ev)
        # columns: [gamma, v, alpha, beta]
        col = lax.broadcasted_iota(jnp.int32, ev.shape, 1)
        out_ref[...] = jnp.where(col == 0, ev,
                                 jnp.where(col == 2, sp + 1.0 + EPS, sp + EPS))


def evidential_gnn_forward(node_coords, node_graph_index, edge_list,
                           edge_lengths, edge_vectors, num_graphs, p,
                           tile_e=TILE_E_DEFAULT):
    """Host glue: edge-feature prep, BN folding, padding, pallas_call."""
    N = node_coords.shape[0]
    E = edge_list.shape[0]
    node_to = edge_list[:, 0].astype(jnp.int32)
    node_from = edge_list[:, 1].astype(jnp.int32)

    # --- rotation/translation invariant edge features (order matches torch.cat) ---
    c_from = node_coords[node_from]
    c_to = node_coords[node_to]
    coord_diff = jnp.sum(jnp.abs(c_from - c_to), axis=1)
    dot_coord = jnp.sum(c_from * c_to, axis=1)
    dot_diff = jnp.sum((c_from - c_to) * edge_vectors, axis=1)
    edge_feats = jnp.stack(
        [edge_lengths[:, 0], coord_diff, dot_coord, dot_diff], axis=1
    ).astype(jnp.float32)                                              # (E, 4)

    # --- fold BatchNorm1d (eval) into Linear-1 ---
    bn_scale = p['bn_w'] / jnp.sqrt(p['bn_rv'] + BN_EPS)
    bn_shift = p['bn_b'] - p['bn_rm'] * bn_scale
    s_state, t_state = bn_scale[:STATE_DIM], bn_shift[:STATE_DIM]
    s_edge, t_edge = bn_scale[STATE_DIM:], bn_shift[STATE_DIM:]
    w1a = (s_state[:, None] * p['w1'][:STATE_DIM, :]).astype(jnp.float32)   # (20, 40)
    # per-edge constant part of Linear-1 (edge features + all BN shifts + bias)
    edge_term = ((edge_feats * s_edge[None, :] + t_edge[None, :]) @ p['w1'][STATE_DIM:, :]
                 + t_state @ p['w1'][:STATE_DIM, :] + p['b1']).astype(jnp.float32)  # (E, 40)

    # --- pad hidden width 150 -> 256 lanes (zero rows/cols keep math identical) ---
    w2p = jnp.pad(p['w2'], ((0, 0), (0, MID_PAD - MID))).astype(jnp.float32)
    b2p = jnp.pad(p['b2'], (0, MID_PAD - MID))[None, :].astype(jnp.float32)
    w3p = jnp.pad(p['w3'], ((0, MID_PAD - MID), (0, 0))).astype(jnp.float32)
    b3p = p['b3'][None, :].astype(jnp.float32)
    b4p = p['b4'][None, :].astype(jnp.float32)
    bop = p['bo'][None, :].astype(jnp.float32)

    # --- edge tiling; padded edges route to a dummy state row (never read back) ---
    tile_e = min(tile_e, _round_up(E, 8))
    E_pad = _round_up(E, tile_e)
    n_tiles = E_pad // tile_e
    dummy = N
    N_state = _round_up(N + 1, 8)          # +1 dummy row for padded edges
    G_pad = _round_up(num_graphs, 8)

    nfrom_p = jnp.full((E_pad,), dummy, jnp.int32).at[:E].set(node_from)
    nto_p = jnp.full((E_pad,), dummy, jnp.int32).at[:E].set(node_to)
    gidx = node_graph_index.astype(jnp.int32)
    edge_term_p = jnp.pad(edge_term, ((0, E_pad - E), (0, 0)))

    grid_spec = pltpu.PrefetchScalarGridSpec(
        num_scalar_prefetch=3,
        grid=(NUM_ROUNDS, n_tiles),
        in_specs=[
            pl.BlockSpec((tile_e, HIDDEN), lambda r, t, *_: (t, 0)),       # edge_term
            pl.BlockSpec((STATE_DIM, HIDDEN), lambda r, t, *_: (0, 0)),    # w1 (BN-scaled)
            pl.BlockSpec((HIDDEN, MID_PAD), lambda r, t, *_: (0, 0)),      # w2
            pl.BlockSpec((1, MID_PAD), lambda r, t, *_: (0, 0)),           # b2
            pl.BlockSpec((MID_PAD, HIDDEN), lambda r, t, *_: (0, 0)),      # w3
            pl.BlockSpec((1, HIDDEN), lambda r, t, *_: (0, 0)),            # b3
            pl.BlockSpec((HIDDEN, STATE_DIM), lambda r, t, *_: (0, 0)),    # w4
            pl.BlockSpec((1, STATE_DIM), lambda r, t, *_: (0, 0)),         # b4
            pl.BlockSpec((STATE_DIM, OUT_DIM), lambda r, t, *_: (0, 0)),   # wo
            pl.BlockSpec((1, OUT_DIM), lambda r, t, *_: (0, 0)),           # bo
        ],
        out_specs=pl.BlockSpec((G_pad, OUT_DIM), lambda r, t, *_: (0, 0)),
        scratch_shapes=[
            pltpu.VMEM((N_state, STATE_DIM), jnp.float32),   # state (pre-round)
            pltpu.VMEM((N_state, STATE_DIM), jnp.float32),   # state (accumulating)
            pltpu.VMEM((tile_e, STATE_DIM), jnp.float32),    # gathered rows
            pltpu.VMEM((tile_e, STATE_DIM), jnp.float32),    # messages
            pltpu.VMEM((G_pad, STATE_DIM), jnp.float32),     # graph pooling
        ],
    )

    # explicit scoped-VMEM sizing (v7x has only 64 MiB physical; default 16/32 MiB)
    footprint = (2 * (_vmem_bytes((tile_e, HIDDEN))
                      + _vmem_bytes((STATE_DIM, HIDDEN))
                      + _vmem_bytes((HIDDEN, MID_PAD)) + _vmem_bytes((1, MID_PAD))
                      + _vmem_bytes((MID_PAD, HIDDEN)) + _vmem_bytes((1, HIDDEN))
                      + _vmem_bytes((HIDDEN, STATE_DIM)) + _vmem_bytes((1, STATE_DIM))
                      + _vmem_bytes((STATE_DIM, OUT_DIM)) + _vmem_bytes((1, OUT_DIM)))
                 + _vmem_bytes((G_pad, OUT_DIM))
                 + 2 * _vmem_bytes((N_state, STATE_DIM))
                 + 2 * _vmem_bytes((tile_e, STATE_DIM))
                 + _vmem_bytes((G_pad, STATE_DIM)))
    vmem_limit = int(min(max(2 * footprint, 16 * 1024 * 1024), 48 * 1024 * 1024))

    out_p = pl.pallas_call(
        gnn_kernel,
        grid_spec=grid_spec,
        out_shape=jax.ShapeDtypeStruct((G_pad, OUT_DIM), jnp.float32),
        compiler_params=pltpu.CompilerParams(
            dimension_semantics=("arbitrary", "arbitrary"),
            vmem_limit_bytes=vmem_limit),
    )(nfrom_p, nto_p, gidx,
      edge_term_p, w1a, w2p, b2p, w3p, b3p,
      p['w4'].astype(jnp.float32), b4p,
      p['wo'].astype(jnp.float32), bop)
    return out_p[:num_graphs]


def reference_forward(node_coords, node_graph_index, edge_list,
                      edge_lengths, edge_vectors, num_graphs, p):
    """Pure-JAX reference mirroring the PyTorch forward (eval mode, f32)."""
    node_to = edge_list[:, 0]
    node_from = edge_list[:, 1]
    c_from = node_coords[node_from]
    c_to = node_coords[node_to]
    coord_diff = jnp.sum(jnp.abs(c_from - c_to), axis=1, keepdims=True)
    dot_coord = jnp.sum(c_from * c_to, axis=1, keepdims=True)
    dot_diff = jnp.sum((c_from - c_to) * edge_vectors, axis=1, keepdims=True)
    N = node_coords.shape[0]
    state = jnp.zeros((N, STATE_DIM), jnp.float32)
    for _ in range(NUM_ROUNDS):
        inp = jnp.concatenate(
            [state[node_from], edge_lengths, coord_diff, dot_coord, dot_diff], axis=1)
        x = (inp - p['bn_rm']) / jnp.sqrt(p['bn_rv'] + BN_EPS) * p['bn_w'] + p['bn_b']
        h = jnp.tanh(x @ p['w1'] + p['b1'])
        h = jnp.tanh(h @ p['w2'] + p['b2'])
        h = jnp.tanh(h @ p['w3'] + p['b3'])
        msg = jnp.tanh(h @ p['w4'] + p['b4'])
        state = state.at[node_to].add(msg)
    gs = jax.ops.segment_sum(state, node_graph_index, num_graphs)
    ev = gs @ p['wo'] + p['bo']
    gamma, v, alpha, beta = ev[:, 0:1], ev[:, 1:2], ev[:, 2:3], ev[:, 3:4]
    return jnp.concatenate(
        [gamma, _softplus(v) + EPS, _softplus(alpha) + 1.0 + EPS, _softplus(beta) + EPS],
        axis=1)


def init_params(key):
    """Deterministic init mimicking the module's __init__ (kaiming fan_out)."""
    ks = jax.random.split(key, 10)

    def kaiming(k, fin, fout):
        return (jax.random.normal(k, (fin, fout)) * jnp.sqrt(2.0 / fout)).astype(jnp.float32)

    def bias(k, fin, dim):
        bound = 1.0 / jnp.sqrt(fin)
        return jax.random.uniform(k, (dim,), minval=-bound, maxval=bound).astype(jnp.float32)

    return {
        # BatchNorm1d(24) default init (eval mode uses running stats)
        'bn_w': jnp.ones((IN_DIM,), jnp.float32),
        'bn_b': jnp.zeros((IN_DIM,), jnp.float32),
        'bn_rm': jnp.zeros((IN_DIM,), jnp.float32),
        'bn_rv': jnp.ones((IN_DIM,), jnp.float32),
        'w1': kaiming(ks[0], IN_DIM, HIDDEN),  'b1': bias(ks[1], IN_DIM, HIDDEN),
        'w2': kaiming(ks[2], HIDDEN, MID),     'b2': bias(ks[3], HIDDEN, MID),
        'w3': kaiming(ks[4], MID, HIDDEN),     'b3': bias(ks[5], MID, HIDDEN),
        'w4': kaiming(ks[6], HIDDEN, STATE_DIM), 'b4': bias(ks[7], HIDDEN, STATE_DIM),
        'wo': kaiming(ks[8], STATE_DIM, OUT_DIM), 'bo': bias(ks[9], STATE_DIM, OUT_DIM),
    }


if __name__ == "__main__":
    key = jax.random.PRNGKey(0)
    k_coord, k_to, k_from, k_param = jax.random.split(key, 4)

    NUM_GRAPHS = 2
    NODES_PER_GRAPH = 8
    EDGES_PER_GRAPH = 16
    N = NUM_GRAPHS * NODES_PER_GRAPH           # 16 nodes
    E = NUM_GRAPHS * EDGES_PER_GRAPH           # 32 edges

    node_graph_index = jnp.repeat(jnp.arange(NUM_GRAPHS), NODES_PER_GRAPH)
    node_coords = jax.random.normal(k_coord, (N, 3), jnp.float32)

    graph_of_edge = jnp.repeat(jnp.arange(NUM_GRAPHS), EDGES_PER_GRAPH)
    node_to = jax.random.randint(k_to, (E,), 0, NODES_PER_GRAPH) + graph_of_edge * NODES_PER_GRAPH
    node_from = jax.random.randint(k_from, (E,), 0, NODES_PER_GRAPH) + graph_of_edge * NODES_PER_GRAPH
    edge_list = jnp.stack([node_to, node_from], axis=1)                # (E, 2): (to, from)
    edge_vectors = node_coords[node_from] - node_coords[node_to]       # (E, 3)
    edge_lengths = jnp.linalg.norm(edge_vectors, axis=1, keepdims=True).astype(jnp.float32)  # (E, 1)

    params = init_params(k_param)

    fwd = jax.jit(functools.partial(evidential_gnn_forward, num_graphs=NUM_GRAPHS, p=params))
    out = fwd(node_coords, node_graph_index, edge_list, edge_lengths, edge_vectors)
    out = jax.block_until_ready(out)

    ref = reference_forward(node_coords, node_graph_index, edge_list,
                            edge_lengths, edge_vectors, NUM_GRAPHS, params)
    assert out.shape == (NUM_GRAPHS, OUT_DIM)
    assert jnp.allclose(out, ref, rtol=2e-2, atol=2e-2), (out, ref)

    print("KERNEL_OK")
</pallas_src>

<mosaic_0001>
module attributes {stable_mosaic.version = 11 : i64} {
  func.func @gnn_kernel(%arg0: i32, %arg1: i32, %arg2: memref<32xi32, #tpu.memory_space<smem>>, %arg3: memref<32xi32, #tpu.memory_space<smem>>, %arg4: memref<16xi32, #tpu.memory_space<smem>>, %arg5: memref<32x40xf32, #tpu.memory_space<vmem>>, %arg6: memref<20x40xf32, #tpu.memory_space<vmem>>, %arg7: memref<40x256xf32, #tpu.memory_space<vmem>>, %arg8: memref<1x256xf32, #tpu.memory_space<vmem>>, %arg9: memref<256x40xf32, #tpu.memory_space<vmem>>, %arg10: memref<1x40xf32, #tpu.memory_space<vmem>>, %arg11: memref<40x20xf32, #tpu.memory_space<vmem>>, %arg12: memref<1x20xf32, #tpu.memory_space<vmem>>, %arg13: memref<20x4xf32, #tpu.memory_space<vmem>>, %arg14: memref<1x4xf32, #tpu.memory_space<vmem>>, %arg15: memref<8x4xf32, #tpu.memory_space<vmem>>, %arg16: memref<24x20xf32, #tpu.memory_space<vmem>>, %arg17: memref<24x20xf32, #tpu.memory_space<vmem>>, %arg18: memref<32x20xf32, #tpu.memory_space<vmem>>, %arg19: memref<32x20xf32, #tpu.memory_space<vmem>>, %arg20: memref<8x20xf32, #tpu.memory_space<vmem>>) attributes {dimension_semantics = [#tpu.dimension_semantics<arbitrary>, #tpu.dimension_semantics<arbitrary>], iteration_bounds = array<i64: 3, 1>, scalar_prefetch = 3 : i64, scratch_operands = 5 : i64, tpu.core_type = #tpu.core_type<tc>, window_params = [{transform_indices = @transform_0, window_bounds = array<i64: 32, 40>}, {pipeline_mode = #tpu.pipeline_mode<synchronous>, transform_indices = @transform_1, window_bounds = array<i64: 20, 40>}, {pipeline_mode = #tpu.pipeline_mode<synchronous>, transform_indices = @transform_2, window_bounds = array<i64: 40, 256>}, {pipeline_mode = #tpu.pipeline_mode<synchronous>, transform_indices = @transform_3, window_bounds = array<i64: 1, 256>}, {pipeline_mode = #tpu.pipeline_mode<synchronous>, transform_indices = @transform_4, window_bounds = array<i64: 256, 40>}, {pipeline_mode = #tpu.pipeline_mode<synchronous>, transform_indices = @transform_5, window_bounds = array<i64: 1, 40>}, {pipeline_mode = #tpu.pipeline_mode<synchronous>, transform_indices = @transform_6, window_bounds = array<i64: 40, 20>}, {pipeline_mode = #tpu.pipeline_mode<synchronous>, transform_indices = @transform_7, window_bounds = array<i64: 1, 20>}, {pipeline_mode = #tpu.pipeline_mode<synchronous>, transform_indices = @transform_8, window_bounds = array<i64: 20, 4>}, {pipeline_mode = #tpu.pipeline_mode<synchronous>, transform_indices = @transform_9, window_bounds = array<i64: 1, 4>}, {pipeline_mode = #tpu.pipeline_mode<synchronous>, transform_indices = @transform_10, window_bounds = array<i64: 8, 4>}]} {
    %c32_i32 = arith.constant 32 : i32
    %0 = arith.muli %arg1, %c32_i32 : i32
    %c0_i32 = arith.constant 0 : i32
    %1 = arith.cmpi eq, %arg0, %c0_i32 : i32
    %c0_i32_0 = arith.constant 0 : i32
    %2 = arith.cmpi eq, %arg1, %c0_i32_0 : i32
    %3 = arith.andi %1, %2 : i1
    %4 = arith.extui %3 : i1 to i32
    %c0_i32_1 = arith.constant 0 : i32
    %5 = arith.cmpi ne, %4, %c0_i32_1 : i32
    scf.if %5 {
      %cst_35 = arith.constant 0.000000e+00 : f32
      %46 = vector.broadcast %cst_35 : f32 to vector<24x20xf32>
      %c0_36 = arith.constant 0 : index
      %c0_37 = arith.constant 0 : index
      %47 = vector.load %arg16[%c0_36, %c0_37] : memref<24x20xf32, #tpu.memory_space<vmem>>, vector<24x20xf32>
      tpu.vector_store %arg16[%c0_36, %c0_37], %46 {strides = array<i32>} : memref<24x20xf32, #tpu.memory_space<vmem>>, vector<24x20xf32>,
      %cst_38 = arith.constant 0.000000e+00 : f32
      %48 = vector.broadcast %cst_38 : f32 to vector<24x20xf32>
      %c0_39 = arith.constant 0 : index
      %c0_40 = arith.constant 0 : index
      %49 = vector.load %arg17[%c0_39, %c0_40] : memref<24x20xf32, #tpu.memory_space<vmem>>, vector<24x20xf32>
      tpu.vector_store %arg17[%c0_39, %c0_40], %48 {strides = array<i32>} : memref<24x20xf32, #tpu.memory_space<vmem>>, vector<24x20xf32>,
    } else {
    }
    %c0_i32_2 = arith.constant 0 : i32
    %6 = arith.cmpi eq, %arg0, %c0_i32_2 : i32
    %7 = arith.extui %6 : i1 to i32
    %c0_i32_3 = arith.constant 0 : i32
    %8 = arith.cmpi ne, %7, %c0_i32_3 : i32
    scf.if %8 {
      %cst_35 = arith.constant 0.000000e+00 : f32
      %46 = vector.broadcast %cst_35 : f32 to vector<32x20xf32>
      %c0_36 = arith.constant 0 : index
      %c0_37 = arith.constant 0 : index
      %47 = vector.load %arg18[%c0_36, %c0_37] : memref<32x20xf32, #tpu.memory_space<vmem>>, vector<32x20xf32>
      tpu.vector_store %arg18[%c0_36, %c0_37], %46 {strides = array<i32>} : memref<32x20xf32, #tpu.memory_space<vmem>>, vector<32x20xf32>,
    } else {
    }
    %c0_i32_4 = arith.constant 0 : i32
    %9 = arith.cmpi sgt, %arg0, %c0_i32_4 : i32
    %10 = arith.extui %9 : i1 to i32
    %c0_i32_5 = arith.constant 0 : i32
    %11 = arith.cmpi ne, %10, %c0_i32_5 : i32
    scf.if %11 {
      %c0_i32_35 = arith.constant 0 : i32
      %c32_i32_36 = arith.constant 32 : i32
      %46 = arith.addi %c0_i32_35, %c32_i32_36 : i32
      %c1_i32_37 = arith.constant 1 : i32
      scf.for %arg21 = %c0_i32_35 to %46 step %c1_i32_37  : i32 {
        %47 = arith.addi %0, %arg21 : i32
        %48 = arith.index_cast %47 : i32 to index
        %49 = memref.load %arg2[%48] : memref<32xi32, #tpu.memory_space<smem>>
        %50 = arith.index_cast %49 : i32 to index
        %c0_39 = arith.constant 0 : index
        %51 = vector.load %arg16[%50, %c0_39] : memref<24x20xf32, #tpu.memory_space<vmem>>, vector<1x20xf32>
        %52 = arith.index_cast %arg21 : i32 to index
        %c0_40 = arith.constant 0 : index
        %53 = vector.load %arg18[%52, %c0_40] : memref<32x20xf32, #tpu.memory_space<vmem>>, vector<1x20xf32>
        tpu.vector_store %arg18[%52, %c0_40], %51 {strides = array<i32>} : memref<32x20xf32, #tpu.memory_space<vmem>>, vector<1x20xf32>,
      }
      %c32_i32_38 = arith.constant 32 : i32
    } else {
    }
    %c0 = arith.constant 0 : index
    %c0_6 = arith.constant 0 : index
    %12 = vector.load %arg18[%c0, %c0_6] : memref<32x20xf32, #tpu.memory_space<vmem>>, vector<32x20xf32>
    %c0_7 = arith.constant 0 : index
    %c0_8 = arith.constant 0 : index
    %13 = vector.load %arg6[%c0_7, %c0_8] : memref<20x40xf32, #tpu.memory_space<vmem>>, vector<20x40xf32>
    %cst = arith.constant dense<0.000000e+00> : vector<32x40xf32>
    %14 = tpu.matmul %12, %13, %cst {dimension_numbers = #tpu.dot_dimension_numbers<[1], [0], [0], [1], [0, 0, 1, 1], [], []>} : vector<32x20xf32>, vector<20x40xf32>, vector<32x40xf32> -> vector<32x40xf32>
    %c0_9 = arith.constant 0 : index
    %c0_10 = arith.constant 0 : index
    %15 = vector.load %arg5[%c0_9, %c0_10] : memref<32x40xf32, #tpu.memory_space<vmem>>, vector<32x40xf32>
    %16 = arith.addf %14, %15 : vector<32x40xf32>
    %17 = math.tanh %16 : vector<32x40xf32>
    %c0_11 = arith.constant 0 : index
    %c0_12 = arith.constant 0 : index
    %18 = vector.load %arg7[%c0_11, %c0_12] : memref<40x256xf32, #tpu.memory_space<vmem>>, vector<40x256xf32>
    %cst_13 = arith.constant dense<0.000000e+00> : vector<32x256xf32>
    %19 = tpu.matmul %17, %18, %cst_13 {dimension_numbers = #tpu.dot_dimension_numbers<[1], [0], [0], [1], [0, 0, 1, 1], [], []>} : vector<32x40xf32>, vector<40x256xf32>, vector<32x256xf32> -> vector<32x256xf32>
    %c0_14 = arith.constant 0 : index
    %c0_15 = arith.constant 0 : index
    %20 = vector.load %arg8[%c0_14, %c0_15] : memref<1x256xf32, #tpu.memory_space<vmem>>, vector<1x256xf32>
    %21 = vector.broadcast %20 : vector<1x256xf32> to vector<32x256xf32>
    %22 = arith.addf %19, %21 : vector<32x256xf32>
    %23 = math.tanh %22 : vector<32x256xf32>
    %c0_16 = arith.constant 0 : index
    %c0_17 = arith.constant 0 : index
    %24 = vector.load %arg9[%c0_16, %c0_17] : memref<256x40xf32, #tpu.memory_space<vmem>>, vector<256x40xf32>
    %cst_18 = arith.constant dense<0.000000e+00> : vector<32x40xf32>
    %25 = tpu.matmul %23, %24, %cst_18 {dimension_numbers = #tpu.dot_dimension_numbers<[1], [0], [0], [1], [0, 0, 1, 1], [], []>} : vector<32x256xf32>, vector<256x40xf32>, vector<32x40xf32> -> vector<32x40xf32>
    %c0_19 = arith.constant 0 : index
    %c0_20 = arith.constant 0 : index
    %26 = vector.load %arg10[%c0_19, %c0_20] : memref<1x40xf32, #tpu.memory_space<vmem>>, vector<1x40xf32>
    %27 = vector.broadcast %26 : vector<1x40xf32> to vector<32x40xf32>
    %28 = arith.addf %25, %27 : vector<32x40xf32>
    %29 = math.tanh %28 : vector<32x40xf32>
    %c0_21 = arith.constant 0 : index
    %c0_22 = arith.constant 0 : index
    %30 = vector.load %arg11[%c0_21, %c0_22] : memref<40x20xf32, #tpu.memory_space<vmem>>, vector<40x20xf32>
    %cst_23 = arith.constant dense<0.000000e+00> : vector<32x20xf32>
    %31 = tpu.matmul %29, %30, %cst_23 {dimension_numbers = #tpu.dot_dimension_numbers<[1], [0], [0], [1], [0, 0, 1, 1], [], []>} : vector<32x40xf32>, vector<40x20xf32>, vector<32x20xf32> -> vector<32x20xf32>
    %c0_24 = arith.constant 0 : index
    %c0_25 = arith.constant 0 : index
    %32 = vector.load %arg12[%c0_24, %c0_25] : memref<1x20xf32, #tpu.memory_space<vmem>>, vector<1x20xf32>
    %33 = vector.broadcast %32 : vector<1x20xf32> to vector<32x20xf32>
    %34 = arith.addf %31, %33 : vector<32x20xf32>
    %35 = math.tanh %34 : vector<32x20xf32>
    %c0_26 = arith.constant 0 : index
    %c0_27 = arith.constant 0 : index
    %36 = vector.load %arg19[%c0_26, %c0_27] : memref<32x20xf32, #tpu.memory_space<vmem>>, vector<32x20xf32>
    tpu.vector_store %arg19[%c0_26, %c0_27], %35 {strides = array<i32>} : memref<32x20xf32, #tpu.memory_space<vmem>>, vector<32x20xf32>,
    %c0_i32_28 = arith.constant 0 : i32
    %c32_i32_29 = arith.constant 32 : i32
    %37 = arith.addi %c0_i32_28, %c32_i32_29 : i32
    %c1_i32 = arith.constant 1 : i32
    scf.for %arg21 = %c0_i32_28 to %37 step %c1_i32  : i32 {
      %46 = arith.addi %0, %arg21 : i32
      %47 = arith.index_cast %46 : i32 to index
      %48 = memref.load %arg3[%47] : memref<32xi32, #tpu.memory_space<smem>>
      %49 = arith.index_cast %48 : i32 to index
      %c0_35 = arith.constant 0 : index
      %50 = vector.load %arg17[%49, %c0_35] : memref<24x20xf32, #tpu.memory_space<vmem>>, vector<1x20xf32>
      %51 = arith.index_cast %arg21 : i32 to index
      %c0_36 = arith.constant 0 : index
      %52 = vector.load %arg19[%51, %c0_36] : memref<32x20xf32, #tpu.memory_space<vmem>>, vector<1x20xf32>
      %53 = arith.addf %50, %52 : vector<1x20xf32>
      %54 = arith.index_cast %48 : i32 to index
      %c0_37 = arith.constant 0 : index
      %55 = vector.load %arg17[%54, %c0_37] : memref<24x20xf32, #tpu.memory_space<vmem>>, vector<1x20xf32>
      tpu.vector_store %arg17[%54, %c0_37], %53 {strides = array<i32>} : memref<24x20xf32, #tpu.memory_space<vmem>>, vector<1x20xf32>,
    }
    %c32_i32_30 = arith.constant 32 : i32
    %c0_i32_31 = arith.constant 0 : i32
    %38 = arith.cmpi eq, %arg1, %c0_i32_31 : i32
    %39 = arith.extui %38 : i1 to i32
    %c0_i32_32 = arith.constant 0 : i32
    %40 = arith.cmpi ne, %39, %c0_i32_32 : i32
    scf.if %40 {
      %c0_35 = arith.constant 0 : index
      %c0_36 = arith.constant 0 : index
      %46 = vector.load %arg17[%c0_35, %c0_36] : memref<24x20xf32, #tpu.memory_space<vmem>>, vector<24x20xf32>
      %c0_37 = arith.constant 0 : index
      %c0_38 = arith.constant 0 : index
      %47 = vector.load %arg16[%c0_37, %c0_38] : memref<24x20xf32, #tpu.memory_space<vmem>>, vector<24x20xf32>
      tpu.vector_store %arg16[%c0_37, %c0_38], %46 {strides = array<i32>} : memref<24x20xf32, #tpu.memory_space<vmem>>, vector<24x20xf32>,
    } else {
    }
    %c2_i32 = arith.constant 2 : i32
    %41 = arith.cmpi eq, %arg0, %c2_i32 : i32
    %c0_i32_33 = arith.constant 0 : i32
    %42 = arith.cmpi eq, %arg1, %c0_i32_33 : i32
    %43 = arith.andi %41, %42 : i1
    %44 = arith.extui %43 : i1 to i32
    %c0_i32_34 = arith.constant 0 : i32
    %45 = arith.cmpi ne, %44, %c0_i32_34 : i32
    scf.if %45 {
      %cst_35 = arith.constant 0.000000e+00 : f32
      %46 = vector.broadcast %cst_35 : f32 to vector<8x20xf32>
      %c0_36 = arith.constant 0 : index
      %c0_37 = arith.constant 0 : index
      %47 = vector.load %arg20[%c0_36, %c0_37] : memref<8x20xf32, #tpu.memory_space<vmem>>, vector<8x20xf32>
      tpu.vector_store %arg20[%c0_36, %c0_37], %46 {strides = array<i32>} : memref<8x20xf32, #tpu.memory_space<vmem>>, vector<8x20xf32>,
      %c0_i32_38 = arith.constant 0 : i32
      %c16_i32 = arith.constant 16 : i32
      %48 = arith.addi %c0_i32_38, %c16_i32 : i32
      %c1_i32_39 = arith.constant 1 : i32
      scf.for %arg21 = %c0_i32_38 to %48 step %c1_i32_39  : i32 {
        %77 = arith.index_cast %arg21 : i32 to index
        %78 = memref.load %arg4[%77] : memref<16xi32, #tpu.memory_space<smem>>
        %79 = arith.index_cast %78 : i32 to index
        %c0_57 = arith.constant 0 : index
        %80 = vector.load %arg20[%79, %c0_57] : memref<8x20xf32, #tpu.memory_space<vmem>>, vector<1x20xf32>
        %81 = arith.index_cast %arg21 : i32 to index
        %c0_58 = arith.constant 0 : index
        %82 = vector.load %arg17[%81, %c0_58] : memref<24x20xf32, #tpu.memory_space<vmem>>, vector<1x20xf32>
        %83 = arith.addf %80, %82 : vector<1x20xf32>
        %84 = arith.index_cast %78 : i32 to index
        %c0_59 = arith.constant 0 : index
        %85 = vector.load %arg20[%84, %c0_59] : memref<8x20xf32, #tpu.memory_space<vmem>>, vector<1x20xf32>
        tpu.vector_store %arg20[%84, %c0_59], %83 {strides = array<i32>} : memref<8x20xf32, #tpu.memory_space<vmem>>, vector<1x20xf32>,
      }
      %c16_i32_40 = arith.constant 16 : i32
      %c0_41 = arith.constant 0 : index
      %c0_42 = arith.constant 0 : index
      %49 = vector.load %arg20[%c0_41, %c0_42] : memref<8x20xf32, #tpu.memory_space<vmem>>, vector<8x20xf32>
      %c0_43 = arith.constant 0 : index
      %c0_44 = arith.constant 0 : index
      %50 = vector.load %arg13[%c0_43, %c0_44] : memref<20x4xf32, #tpu.memory_space<vmem>>, vector<20x4xf32>
      %cst_45 = arith.constant dense<0.000000e+00> : vector<8x4xf32>
      %51 = tpu.matmul %49, %50, %cst_45 {dimension_numbers = #tpu.dot_dimension_numbers<[1], [0], [0], [1], [0, 0, 1, 1], [], []>} : vector<8x20xf32>, vector<20x4xf32>, vector<8x4xf32> -> vector<8x4xf32>
      %c0_46 = arith.constant 0 : index
      %c0_47 = arith.constant 0 : index
      %52 = vector.load %arg14[%c0_46, %c0_47] : memref<1x4xf32, #tpu.memory_space<vmem>>, vector<1x4xf32>
      %53 = vector.broadcast %52 : vector<1x4xf32> to vector<8x4xf32>
      %54 = arith.addf %51, %53 : vector<8x4xf32>
      %55 = math.absf %54 : vector<8x4xf32>
      %cst_48 = arith.constant 0.000000e+00 : f32
      %56 = vector.broadcast %cst_48 : f32 to vector<8x4xf32>
      %57 = arith.subf %56, %55 : vector<8x4xf32>
      %58 = math.exp %57 : vector<8x4xf32>
      %59 = math.log1p %58 : vector<8x4xf32>
      %cst_49 = arith.constant 0.000000e+00 : f32
      %60 = vector.broadcast %cst_49 : f32 to vector<8x4xf32>
      %61 = arith.maximumf %54, %60 : vector<8x4xf32>
      %62 = arith.addf %59, %61 : vector<8x4xf32>
      %63 = tpu.iota {dimensions = array<i32: 1>} : vector<8x4xi32>
      %c0_i32_50 = arith.constant 0 : i32
      %64 = vector.broadcast %c0_i32_50 : i32 to vector<8x4xi32>
      %65 = arith.cmpi eq, %63, %64 : vector<8x4xi32>
      %c2_i32_51 = arith.constant 2 : i32
      %66 = vector.broadcast %c2_i32_51 : i32 to vector<8x4xi32>
      %67 = arith.cmpi eq, %63, %66 : vector<8x4xi32>
      %cst_52 = arith.constant 1.000000e+00 : f32
      %68 = vector.broadcast %cst_52 : f32 to vector<8x4xf32>
      %69 = arith.addf %62, %68 : vector<8x4xf32>
      %cst_53 = arith.constant 9.99999974E-6 : f32
      %70 = vector.broadcast %cst_53 : f32 to vector<8x4xf32>
      %71 = arith.addf %69, %70 : vector<8x4xf32>
      %cst_54 = arith.constant 9.99999974E-6 : f32
      %72 = vector.broadcast %cst_54 : f32 to vector<8x4xf32>
      %73 = arith.addf %62, %72 : vector<8x4xf32>
      %74 = arith.select %67, %71, %73 : vector<8x4xi1>, vector<8x4xf32>
      %75 = arith.select %65, %54, %74 : vector<8x4xi1>, vector<8x4xf32>
      %c0_55 = arith.constant 0 : index
      %c0_56 = arith.constant 0 : index
      %76 = vector.load %arg15[%c0_55, %c0_56] : memref<8x4xf32, #tpu.memory_space<vmem>>, vector<8x4xf32>
      tpu.vector_store %arg15[%c0_55, %c0_56], %75 {strides = array<i32>} : memref<8x4xf32, #tpu.memory_space<vmem>>, vector<8x4xf32>,
    } else {
    }
    return
  }
  func.func @transform_0(%arg0: i32, %arg1: i32, %arg2: memref<32xi32, #tpu.memory_space<smem>>, %arg3: memref<32xi32, #tpu.memory_space<smem>>, %arg4: memref<16xi32, #tpu.memory_space<smem>>) -> (i32, i32) {
    %c0_i32 = arith.constant 0 : i32
    %c0_i32_0 = arith.constant 0 : i32
    return %arg1, %c0_i32 : i32, i32
  }
  func.func @transform_1(%arg0: i32, %arg1: i32, %arg2: memref<32xi32, #tpu.memory_space<smem>>, %arg3: memref<32xi32, #tpu.memory_space<smem>>, %arg4: memref<16xi32, #tpu.memory_space<smem>>) -> (i32, i32) {
    %c0_i32 = arith.constant 0 : i32
    %c0_i32_0 = arith.constant 0 : i32
    %c0_i32_1 = arith.constant 0 : i32
    return %c0_i32, %c0_i32_0 : i32, i32
  }
  func.func @transform_2(%arg0: i32, %arg1: i32, %arg2: memref<32xi32, #tpu.memory_space<smem>>, %arg3: memref<32xi32, #tpu.memory_space<smem>>, %arg4: memref<16xi32, #tpu.memory_space<smem>>) -> (i32, i32) {
    %c0_i32 = arith.constant 0 : i32
    %c0_i32_0 = arith.constant 0 : i32
    %c0_i32_1 = arith.constant 0 : i32
    return %c0_i32, %c0_i32_0 : i32, i32
  }
  func.func @transform_3(%arg0: i32, %arg1: i32, %arg2: memref<32xi32, #tpu.memory_space<smem>>, %arg3: memref<32xi32, #tpu.memory_space<smem>>, %arg4: memref<16xi32, #tpu.memory_space<smem>>) -> (i32, i32) {
    %c0_i32 = arith.constant 0 : i32
    %c0_i32_0 = arith.constant 0 : i32
    %c0_i32_1 = arith.constant 0 : i32
    return %c0_i32, %c0_i32_0 : i32, i32
  }
  func.func @transform_4(%arg0: i32, %arg1: i32, %arg2: memref<32xi32, #tpu.memory_space<smem>>, %arg3: memref<32xi32, #tpu.memory_space<smem>>, %arg4: memref<16xi32, #tpu.memory_space<smem>>) -> (i32, i32) {
    %c0_i32 = arith.constant 0 : i32
    %c0_i32_0 = arith.constant 0 : i32
    %c0_i32_1 = arith.constant 0 : i32
    return %c0_i32, %c0_i32_0 : i32, i32
  }
  func.func @transform_5(%arg0: i32, %arg1: i32, %arg2: memref<32xi32, #tpu.memory_space<smem>>, %arg3: memref<32xi32, #tpu.memory_space<smem>>, %arg4: memref<16xi32, #tpu.memory_space<smem>>) -> (i32, i32) {
    %c0_i32 = arith.constant 0 : i32
    %c0_i32_0 = arith.constant 0 : i32
    %c0_i32_1 = arith.constant 0 : i32
    return %c0_i32, %c0_i32_0 : i32, i32
  }
  func.func @transform_6(%arg0: i32, %arg1: i32, %arg2: memref<32xi32, #tpu.memory_space<smem>>, %arg3: memref<32xi32, #tpu.memory_space<smem>>, %arg4: memref<16xi32, #tpu.memory_space<smem>>) -> (i32, i32) {
    %c0_i32 = arith.constant 0 : i32
    %c0_i32_0 = arith.constant 0 : i32
    %c0_i32_1 = arith.constant 0 : i32
    return %c0_i32, %c0_i32_0 : i32, i32
  }
  func.func @transform_7(%arg0: i32, %arg1: i32, %arg2: memref<32xi32, #tpu.memory_space<smem>>, %arg3: memref<32xi32, #tpu.memory_space<smem>>, %arg4: memref<16xi32, #tpu.memory_space<smem>>) -> (i32, i32) {
    %c0_i32 = arith.constant 0 : i32
    %c0_i32_0 = arith.constant 0 : i32
    %c0_i32_1 = arith.constant 0 : i32
    return %c0_i32, %c0_i32_0 : i32, i32
  }
  func.func @transform_8(%arg0: i32, %arg1: i32, %arg2: memref<32xi32, #tpu.memory_space<smem>>, %arg3: memref<32xi32, #tpu.memory_space<smem>>, %arg4: memref<16xi32, #tpu.memory_space<smem>>) -> (i32, i32) {
    %c0_i32 = arith.constant 0 : i32
    %c0_i32_0 = arith.constant 0 : i32
    %c0_i32_1 = arith.constant 0 : i32
    return %c0_i32, %c0_i32_0 : i32, i32
  }
  func.func @transform_9(%arg0: i32, %arg1: i32, %arg2: memref<32xi32, #tpu.memory_space<smem>>, %arg3: memref<32xi32, #tpu.memory_space<smem>>, %arg4: memref<16xi32, #tpu.memory_space<smem>>) -> (i32, i32) {
    %c0_i32 = arith.constant 0 : i32
    %c0_i32_0 = arith.constant 0 : i32
    %c0_i32_1 = arith.constant 0 : i32
    return %c0_i32, %c0_i32_0 : i32, i32
  }
  func.func @transform_10(%arg0: i32, %arg1: i32, %arg2: memref<32xi32, #tpu.memory_space<smem>>, %arg3: memref<32xi32, #tpu.memory_space<smem>>, %arg4: memref<16xi32, #tpu.memory_space<smem>>) -> (i32, i32) {
    %c0_i32 = arith.constant 0 : i32
    %c0_i32_0 = arith.constant 0 : i32
    %c0_i32_1 = arith.constant 0 : i32
    return %c0_i32, %c0_i32_0 : i32, i32
  }
}

</mosaic_0001>

<llo_original>
// kernel: evidential_gnn_forward.1
$region0: #{evidential_gnn_forward.1}
  #allocation0 [shape = 'u32[]', space=smem, size = 0x4, offset = 0x4, fixed_abs, tag = 'smem constant byte address 0x4 - core index']
  #allocation1 [shape = 'u32[144,128]{1,0:T(1,128)}', space=vmem, size = 0x12000, scoped, tag = 'internal scratch']
  #allocation2 [shape = 'f32[24,20]{1,0:T(8,128)}', space=vmem, size = 0x3000, scoped, tag = 'scratch operand']
  #allocation3 [shape = 'f32[24,20]{1,0:T(8,128)}', space=vmem, size = 0x3000, scoped, tag = 'scratch operand']
  #allocation4 [shape = 'f32[32,20]{1,0:T(8,128)}', space=vmem, size = 0x4000, scoped, tag = 'scratch operand']
  #allocation5 [shape = 'f32[32,20]{1,0:T(8,128)}', space=vmem, size = 0x4000, scoped, tag = 'scratch operand']
  #allocation6 [shape = 'f32[8,20]{1,0:T(8,128)}', space=vmem, size = 0x1000, scoped, tag = 'scratch operand']
  #allocation7 [shape = 's32[1]{0}', space=sflag, size = 0x4, scoped, tag = 'scoped memory for evidential_gnn_forward.1']
  #allocation8 [shape = 'u8[512]{0}', space=smem, size = 0x200, scoped, tag = 'prefetched SMEM operand 0']
  #allocation9 [shape = 'u8[512]{0}', space=smem, size = 0x200, scoped, tag = 'prefetched SMEM operand 1']
  #allocation10 [shape = 'u8[512]{0}', space=smem, size = 0x200, scoped, tag = 'prefetched SMEM operand 2']
  %s0 = inlined_call_operand.vmem [shape: s32[32], index: 0, kind: input, shape index: {}]
  %s1 = inlined_call_operand.vmem [shape: s32[32], index: 1, kind: input, shape index: {}]
  %s2 = inlined_call_operand.vmem [shape: s32[16], index: 2, kind: input, shape index: {}]
  %s3 = inlined_call_operand.vmem [shape: f32[32,40], index: 3, kind: input, shape index: {}]
  %s4 = inlined_call_operand.vmem [shape: f32[20,40], index: 4, kind: input, shape index: {}]
  %s5 = inlined_call_operand.vmem [shape: f32[40,256], index: 5, kind: input, shape index: {}]
  %s6 = inlined_call_operand.vmem [shape: f32[1,256], index: 6, kind: input, shape index: {}]
  %s7 = inlined_call_operand.vmem [shape: f32[256,40], index: 7, kind: input, shape index: {}]
  %s8 = inlined_call_operand.vmem [shape: f32[1,40], index: 8, kind: input, shape index: {}]
  %s9 = inlined_call_operand.vmem [shape: f32[40,20], index: 9, kind: input, shape index: {}]
  %s10 = inlined_call_operand.vmem [shape: f32[1,20], index: 10, kind: input, shape index: {}]
  %s11 = inlined_call_operand.vmem [shape: f32[20,4], index: 11, kind: input, shape index: {}]
  %s12 = inlined_call_operand.vmem [shape: f32[1,4], index: 12, kind: input, shape index: {}]
  %s13 = inlined_call_operand.vmem [shape: f32[8,4], index: 13, kind: output, shape index: {}]
  %s14 = sld [smem:[#allocation0]]
  $region114: #{evidential_gnn_forward.1} parent=0
    _
  %s16 = ssub.s32 1, %s14
  %s17 = scalar_select 0, %s16, %s14
  %s18 = sshll.u32 %s0, 4
  %s19 = int_to_ptr.vmem [resolvable:$true] %s18
  %21 = dma.vmem_to_smem %s19, 16, [#allocation8], [#allocation7]
  %s22 = sshll.u32 %s1, 4
  %s23 = int_to_ptr.vmem [resolvable:$true] %s22
  %25 = dma.vmem_to_smem %s23, 16, [#allocation9], [#allocation7]
  %s26 = sshll.u32 %s2, 4
  %s27 = int_to_ptr.vmem [resolvable:$true] %s26
  %29 = dma.vmem_to_smem %s27, 16, [#allocation10], [#allocation7]
  %30 = dma.done [#allocation7], 48
  %31 = sfence
  loop: start=0, step=1, limit=5
  $region2: #{evidential_gnn_forward.1} parent=0 // loop_pre_header
    _
  $region3: #{evidential_gnn_forward.1} parent=0 // loop_header
    %s33 = sphi 0, %s37
    %p34 = scmp.ge.s32.totalorder %s33, 5
    %s40 = sphi 0, %s52
    %s41 = sphi 0, %s48
    %s42 = sphi 0, %s40
    %s43 = sphi 0, %s41
    %s44 = sphi 0, %s42
    %s45 = sphi 0, %s43
    %s55 = sphi 0, %s57
    %s58 = sphi 0, %s55
    %s59 = sphi 0, %s58
    %s75 = sphi 0, %s59
    %s79 = sphi 0, %s79
    %s81 = sphi 0, %s79
    %s82 = sphi 0, %s81
    %s96 = sphi 0, %s82
    %s100 = sphi 0, %s100
    %s102 = sphi 0, %s100
    %s103 = sphi 0, %s102
    %s117 = sphi 0, %s103
    %s121 = sphi 0, %s121
    %s123 = sphi 0, %s121
    %s124 = sphi 0, %s123
    %s138 = sphi 0, %s124
    %s142 = sphi 0, %s142
    %s144 = sphi 0, %s142
    %s145 = sphi 0, %s144
    %s159 = sphi 0, %s145
    %s163 = sphi 0, %s163
    %s165 = sphi 0, %s163
    %s166 = sphi 0, %s165
    %s180 = sphi 0, %s166
    %s184 = sphi 0, %s184
    %s186 = sphi 0, %s184
    %s187 = sphi 0, %s186
    %s201 = sphi 0, %s187
    %s205 = sphi 0, %s205
    %s207 = sphi 0, %s205
    %s208 = sphi 0, %s207
    %s222 = sphi 0, %s208
    %s226 = sphi 0, %s226
    %s228 = sphi 0, %s226
    %s229 = sphi 0, %s228
    %s243 = sphi 0, %s229
    %s247 = sphi 0, %s247
    %s249 = sphi 0, %s247
    %s250 = sphi 0, %s249
    %s264 = sphi 0, %s250
    %s268 = sphi 0, %s268
    %s270 = sphi 0, %s268
    %s271 = sphi 0, %s270
    %s285 = sphi 0, %s271
  $region4: #{evidential_gnn_forward.1} parent=0 // loop_header_branch
    %36 = sbr.rel (%p34) target = $region8
  $region5: #{evidential_gnn_forward.1} parent=0 // loop_body
    %s38 = ssub.s32 %s33, 1
    %s39 = ssub.s32 %s33, 2
    %s46 = sadd.s32 1, %s41
    %p47 = scmp.ge.s32.totalorder %s46, 1
    %s48 = scalar_select %p47, 0, %s46
    %s49 = sadd.s32 1, %s40
    %s50 = scalar_select %p47, %s49, %s40
    %p51 = scmp.ge.s32.totalorder %s50, 3
    %s52 = scalar_select %p51, 0, %s50
    %s53 = ssub.s32 %s41, %s48
    %p54 = scmp.eq.s32.totalorder %s53, 0
    %s56 = sadd.s32 %s55, 1
    %s57 = scalar_select %p54, %s55, %s56
    %p60 = pneg %p54
    %p61 = scmp.eq.s32.totalorder %s33, 2
    %p62 = por %p60, %p61
    %p63 = scmp.ne.s32.totalorder %s55, %s58
    %p64 = scmp.eq.s32.totalorder %s33, 0
    %p65 = por %p63, %p64
    %p66 = scmp.ne.s32.totalorder %s55, %s58
    %p67 = scmp.eq.s32.totalorder %s38, 2
    %p68 = por %p66, %p67
    %p69 = scmp.ne.s32.totalorder %s58, %s59
    %p70 = scmp.eq.s32.totalorder %s38, 0
    %p71 = por %p69, %p70
    %p72 = scmp.ne.s32.totalorder %s58, %s59
    %p73 = scmp.eq.s32.totalorder %s39, 2
    %p74 = por %p72, %p73
    %p76 = scmp.ne.s32.totalorder %s59, %s75
    %p77 = scmp.eq.s32.totalorder %s39, 0
    %p78 = por %p76, %p77
    %s80 = sadd.s32 %s79, 1
    %p83 = scmp.eq.s32.totalorder %s33, 2
    %p84 = scmp.ne.s32.totalorder %s79, %s81
    %p85 = scmp.eq.s32.totalorder %s33, 0
    %p86 = por %p84, %p85
    %p87 = scmp.ne.s32.totalorder %s79, %s81
    %p88 = scmp.eq.s32.totalorder %s38, 2
    %p89 = por %p87, %p88
    %p90 = scmp.ne.s32.totalorder %s81, %s82
    %p91 = scmp.eq.s32.totalorder %s38, 0
    %p92 = por %p90, %p91
    %p93 = scmp.ne.s32.totalorder %s81, %s82
    %p94 = scmp.eq.s32.totalorder %s39, 2
    %p95 = por %p93, %p94
    %p97 = scmp.ne.s32.totalorder %s82, %s96
    %p98 = scmp.eq.s32.totalorder %s39, 0
    %p99 = por %p97, %p98
    %s101 = sadd.s32 %s100, 1
    %p104 = scmp.eq.s32.totalorder %s33, 2
    %p105 = scmp.ne.s32.totalorder %s100, %s102
    %p106 = scmp.eq.s32.totalorder %s33, 0
    %p107 = por %p105, %p106
    %p108 = scmp.ne.s32.totalorder %s100, %s102
    %p109 = scmp.eq.s32.totalorder %s38, 2
    %p110 = por %p108, %p109
    %p111 = scmp.ne.s32.totalorder %s102, %s103
    %p112 = scmp.eq.s32.totalorder %s38, 0
    %p113 = por %p111, %p112
    %p114 = scmp.ne.s32.totalorder %s102, %s103
    %p115 = scmp.eq.s32.totalorder %s39, 2
    %p116 = por %p114, %p115
    %p118 = scmp.ne.s32.totalorder %s103, %s117
    %p119 = scmp.eq.s32.totalorder %s39, 0
    %p120 = por %p118, %p119
    %s122 = sadd.s32 %s121, 1
    %p125 = scmp.eq.s32.totalorder %s33, 2
    %p126 = scmp.ne.s32.totalorder %s121, %s123
    %p127 = scmp.eq.s32.totalorder %s33, 0
    %p128 = por %p126, %p127
    %p129 = scmp.ne.s32.totalorder %s121, %s123
    %p130 = scmp.eq.s32.totalorder %s38, 2
    %p131 = por %p129, %p130
    %p132 = scmp.ne.s32.totalorder %s123, %s124
    %p133 = scmp.eq.s32.totalorder %s38, 0
    %p134 = por %p132, %p133
    %p135 = scmp.ne.s32.totalorder %s123, %s124
    %p136 = scmp.eq.s32.totalorder %s39, 2
    %p137 = por %p135, %p136
    %p139 = scmp.ne.s32.totalorder %s124, %s138
    %p140 = scmp.eq.s32.totalorder %s39, 0
    %p141 = por %p139, %p140
    %s143 = sadd.s32 %s142, 1
    %p146 = scmp.eq.s32.totalorder %s33, 2
    %p147 = scmp.ne.s32.totalorder %s142, %s144
    %p148 = scmp.eq.s32.totalorder %s33, 0
    %p149 = por %p147, %p148
    %p150 = scmp.ne.s32.totalorder %s142, %s144
    %p151 = scmp.eq.s32.totalorder %s38, 2
    %p152 = por %p150, %p151
    %p153 = scmp.ne.s32.totalorder %s144, %s145
    %p154 = scmp.eq.s32.totalorder %s38, 0
    %p155 = por %p153, %p154
    %p156 = scmp.ne.s32.totalorder %s144, %s145
    %p157 = scmp.eq.s32.totalorder %s39, 2
    %p158 = por %p156, %p157
    %p160 = scmp.ne.s32.totalorder %s145, %s159
    %p161 = scmp.eq.s32.totalorder %s39, 0
    %p162 = por %p160, %p161
    %s164 = sadd.s32 %s163, 1
    %p167 = scmp.eq.s32.totalorder %s33, 2
    %p168 = scmp.ne.s32.totalorder %s163, %s165
    %p169 = scmp.eq.s32.totalorder %s33, 0
    %p170 = por %p168, %p169
    %p171 = scmp.ne.s32.totalorder %s163, %s165
    %p172 = scmp.eq.s32.totalorder %s38, 2
    %p173 = por %p171, %p172
    %p174 = scmp.ne.s32.totalorder %s165, %s166
    %p175 = scmp.eq.s32.totalorder %s38, 0
    %p176 = por %p174, %p175
    %p177 = scmp.ne.s32.totalorder %s165, %s166
    %p178 = scmp.eq.s32.totalorder %s39, 2
    %p179 = por %p177, %p178
    %p181 = scmp.ne.s32.totalorder %s166, %s180
    %p182 = scmp.eq.s32.totalorder %s39, 0
    %p183 = por %p181, %p182
    %s185 = sadd.s32 %s184, 1
    %p188 = scmp.eq.s32.totalorder %s33, 2
    %p189 = scmp.ne.s32.totalorder %s184, %s186
    %p190 = scmp.eq.s32.totalorder %s33, 0
    %p191 = por %p189, %p190
    %p192 = scmp.ne.s32.totalorder %s184, %s186
    %p193 = scmp.eq.s32.totalorder %s38, 2
    %p194 = por %p192, %p193
    %p195 = scmp.ne.s32.totalorder %s186, %s187
    %p196 = scmp.eq.s32.totalorder %s38, 0
    %p197 = por %p195, %p196
    %p198 = scmp.ne.s32.totalorder %s186, %s187
    %p199 = scmp.eq.s32.totalorder %s39, 2
    %p200 = por %p198, %p199
    %p202 = scmp.ne.s32.totalorder %s187, %s201
    %p203 = scmp.eq.s32.totalorder %s39, 0
    %p204 = por %p202, %p203
    %s206 = sadd.s32 %s205, 1
    %p209 = scmp.eq.s32.totalorder %s33, 2
    %p210 = scmp.ne.s32.totalorder %s205, %s207
    %p211 = scmp.eq.s32.totalorder %s33, 0
    %p212 = por %p210, %p211
    %p213 = scmp.ne.s32.totalorder %s205, %s207
    %p214 = scmp.eq.s32.totalorder %s38, 2
    %p215 = por %p213, %p214
    %p216 = scmp.ne.s32.totalorder %s207, %s208
    %p217 = scmp.eq.s32.totalorder %s38, 0
    %p218 = por %p216, %p217
    %p219 = scmp.ne.s32.totalorder %s207, %s208
    %p220 = scmp.eq.s32.totalorder %s39, 2
    %p221 = por %p219, %p220
    %p223 = scmp.ne.s32.totalorder %s208, %s222
    %p224 = scmp.eq.s32.totalorder %s39, 0
    %p225 = por %p223, %p224
    %s227 = sadd.s32 %s226, 1
    %p230 = scmp.eq.s32.totalorder %s33, 2
    %p231 = scmp.ne.s32.totalorder %s226, %s228
    %p232 = scmp.eq.s32.totalorder %s33, 0
    %p233 = por %p231, %p232
    %p234 = scmp.ne.s32.totalorder %s226, %s228
    %p235 = scmp.eq.s32.totalorder %s38, 2
    %p236 = por %p234, %p235
    %p237 = scmp.ne.s32.totalorder %s228, %s229
    %p238 = scmp.eq.s32.totalorder %s38, 0
    %p239 = por %p237, %p238
    %p240 = scmp.ne.s32.totalorder %s228, %s229
    %p241 = scmp.eq.s32.totalorder %s39, 2
    %p242 = por %p240, %p241
    %p244 = scmp.ne.s32.totalorder %s229, %s243
    %p245 = scmp.eq.s32.totalorder %s39, 0
    %p246 = por %p244, %p245
    %s248 = sadd.s32 %s247, 1
    %p251 = scmp.eq.s32.totalorder %s33, 2
    %p252 = scmp.ne.s32.totalorder %s247, %s249
    %p253 = scmp.eq.s32.totalorder %s33, 0
    %p254 = por %p252, %p253
    %p255 = scmp.ne.s32.totalorder %s247, %s249
    %p256 = scmp.eq.s32.totalorder %s38, 2
    %p257 = por %p255, %p256
    %p258 = scmp.ne.s32.totalorder %s249, %s250
    %p259 = scmp.eq.s32.totalorder %s38, 0
    %p260 = por %p258, %p259
    %p261 = scmp.ne.s32.totalorder %s249, %s250
    %p262 = scmp.eq.s32.totalorder %s39, 2
    %p263 = por %p261, %p262
    %p265 = scmp.ne.s32.totalorder %s250, %s264
    %p266 = scmp.eq.s32.totalorder %s39, 0
    %p267 = por %p265, %p266
    %s269 = sadd.s32 %s268, 1
    %p272 = scmp.eq.s32.totalorder %s33, 2
    %p273 = scmp.ne.s32.totalorder %s268, %s270
    %p274 = scmp.eq.s32.totalorder %s33, 0
    %p275 = por %p273, %p274
    %p276 = scmp.ne.s32.totalorder %s268, %s270
    %p277 = scmp.eq.s32.totalorder %s38, 2
    %p278 = por %p276, %p277
    %p279 = scmp.ne.s32.totalorder %s270, %s271
    %p280 = scmp.eq.s32.totalorder %s38, 0
    %p281 = por %p279, %p280
    %p282 = scmp.ne.s32.totalorder %s270, %s271
    %p283 = scmp.eq.s32.totalorder %s39, 2
    %p284 = por %p282, %p283
    %p286 = scmp.ne.s32.totalorder %s271, %s285
    %p287 = scmp.eq.s32.totalorder %s39, 0
    %p288 = por %p286, %p287
    %p289 = scmp.le.s32.totalorder 1, %s33
    %p290 = scmp.lt.s32.totalorder %s33, 4
    %p291 = pnand %p289, %p290
    %p292 = pneg %p291
    // Predicated region
    $region9: #{evidential_gnn_forward.1} parent=5 // pred_check
      _
    $region10: #{evidential_gnn_forward.1} parent=5 // pred_check_branch
      %294 = sbr.rel (%p291) target = $region12
    $region11: #{evidential_gnn_forward.1} parent=5 // pred_region
      %s295 = ssub.s32 %s33, 1
      // Predicated region
      $region13: #{evidential_gnn_forward.1} parent=11 // pred_check
        %p296 = pneg %p71
      $region14: #{evidential_gnn_forward.1} parent=11 // pred_check_branch
        %298 = sbr.rel (%p296) target = $region16
      $region15: #{evidential_gnn_forward.1} parent=11 // pred_region
        %s299 = smul.u32 4, %s43
        %p300 = scmp.lt.s32.totalorder %s299, 3
        %s301 = scalar_select %p300, %s299, 3
        %s302 = smul.addr %s301, 8
        %s303 = scalar_lea.vmem %s3, %s302
        %s304 = smul.u32 4, %s43
      $region16: #{evidential_gnn_forward.1} parent=11 // pred_fallthru
        _
      // Predicated region
      $region17: #{evidential_gnn_forward.1} parent=11 // pred_check
        %p305 = pneg %p92
      $region18: #{evidential_gnn_forward.1} parent=11 // pred_check_branch
        %307 = sbr.rel (%p305) target = $region20
      $region19: #{evidential_gnn_forward.1} parent=11 // pred_region
        _
      $region20: #{evidential_gnn_forward.1} parent=11 // pred_fallthru
        _
      // Predicated region
      $region21: #{evidential_gnn_forward.1} parent=11 // pred_check
        %p308 = pneg %p113
      $region22: #{evidential_gnn_forward.1} parent=11 // pred_check_branch
        %310 = sbr.rel (%p308) target = $region24
      $region23: #{evidential_gnn_forward.1} parent=11 // pred_region
        _
      $region24: #{evidential_gnn_forward.1} parent=11 // pred_fallthru
        _
      // Predicated region
      $region25: #{evidential_gnn_forward.1} parent=11 // pred_check
        %p311 = pneg %p134
      $region26: #{evidential_gnn_forward.1} parent=11 // pred_check_branch
        %313 = sbr.rel (%p311) target = $region28
      $region27: #{evidential_gnn_forward.1} parent=11 // pred_region
        _
      $region28: #{evidential_gnn_forward.1} parent=11 // pred_fallthru
        _
      // Predicated region
      $region29: #{evidential_gnn_forward.1} parent=11 // pred_check
        %p314 = pneg %p155
      $region30: #{evidential_gnn_forward.1} parent=11 // pred_check_branch
        %316 = sbr.rel (%p314) target = $region32
      $region31: #{evidential_gnn_forward.1} parent=11 // pred_region
        _
      $region32: #{evidential_gnn_forward.1} parent=11 // pred_fallthru
        _
      // Predicated region
      $region33: #{evidential_gnn_forward.1} parent=11 // pred_check
        %p317 = pneg %p176
      $region34: #{evidential_gnn_forward.1} parent=11 // pred_check_branch
        %319 = sbr.rel (%p317) target = $region36
      $region35: #{evidential_gnn_forward.1} parent=11 // pred_region
        _
      $region36: #{evidential_gnn_forward.1} parent=11 // pred_fallthru
        _
      // Predicated region
      $region37: #{evidential_gnn_forward.1} parent=11 // pred_check
        %p320 = pneg %p197
      $region38: #{evidential_gnn_forward.1} parent=11 // pred_check_branch
        %322 = sbr.rel (%p320) target = $region40
      $region39: #{evidential_gnn_forward.1} parent=11 // pred_region
        _
      $region40: #{evidential_gnn_forward.1} parent=11 // pred_fallthru
        _
      // Predicated region
      $region41: #{evidential_gnn_forward.1} parent=11 // pred_check
        %p323 = pneg %p218
      $region42: #{evidential_gnn_forward.1} parent=11 // pred_check_branch
        %325 = sbr.rel (%p323) target = $region44
      $region43: #{evidential_gnn_forward.1} parent=11 // pred_region
        _
      $region44: #{evidential_gnn_forward.1} parent=11 // pred_fallthru
        _
      // Predicated region
      $region45: #{evidential_gnn_forward.1} parent=11 // pred_check
        %p326 = pneg %p239
      $region46: #{evidential_gnn_forward.1} parent=11 // pred_check_branch
        %328 = sbr.rel (%p326) target = $region48
      $region47: #{evidential_gnn_forward.1} parent=11 // pred_region
        _
      $region48: #{evidential_gnn_forward.1} parent=11 // pred_fallthru
        _
      // Predicated region
      $region49: #{evidential_gnn_forward.1} parent=11 // pred_check
        %p329 = pneg %p260
      $region50: #{evidential_gnn_forward.1} parent=11 // pred_check_branch
        %331 = sbr.rel (%p329) target = $region52
      $region51: #{evidential_gnn_forward.1} parent=11 // pred_region
        _
      $region52: #{evidential_gnn_forward.1} parent=11 // pred_fallthru
        _
    $region12: #{evidential_gnn_forward.1} parent=5 // pred_fallthru
      _
    %p332 = scmp.lt.s32.totalorder %s33, 3
    // Predicated region
    $region53: #{evidential_gnn_forward.1} parent=5 // pred_check
      %p333 = pneg %p332
    $region54: #{evidential_gnn_forward.1} parent=5 // pred_check_branch
      %335 = sbr.rel (%p333) target = $region56
    $region55: #{evidential_gnn_forward.1} parent=5 // pred_region
      _
    $region56: #{evidential_gnn_forward.1} parent=5 // pred_fallthru
      _
    %p336 = scmp.le.s32.totalorder 1, %s33
    %p337 = scmp.lt.s32.totalorder %s33, 4
    %p338 = pnand %p336, %p337
    %p339 = pneg %p338
    // Predicated region
    $region57: #{evidential_gnn_forward.1} parent=5 // pred_check
      _
    $region58: #{evidential_gnn_forward.1} parent=5 // pred_check_branch
      %341 = sbr.rel (%p338) target = $region60
    $region59: #{evidential_gnn_forward.1} parent=5 // pred_region
      %s342 = ssub.s32 %s33, 1
      %s343 = smul.u32 4, %s43
      %p344 = scmp.lt.s32.totalorder %s343, 3
      %s345 = scalar_select %p344, %s343, 3
      %s346 = smul.addr %s345, 8
      %s347 = scalar_lea.vmem %s3, %s346
      %p348 = pneg %p71
      %p349 = pneg %p68
      %p350 = pneg %p92
      %p351 = pneg %p89
      %p352 = pneg %p113
      %p353 = pneg %p110
      %p354 = pneg %p134
      %p355 = pneg %p131
      %p356 = pneg %p155
      %p357 = pneg %p152
      %p358 = pneg %p176
      %p359 = pneg %p173
      %p360 = pneg %p197
      %p361 = pneg %p194
      %p362 = pneg %p218
      %p363 = pneg %p215
      %p364 = pneg %p239
      %p365 = pneg %p236
      %p366 = pneg %p260
      %p367 = pneg %p257
      %p368 = pneg %p281
      %p369 = pneg %p278
      %s370 = smul.u32 4, %s43
      %p371 = scmp.lt.s32.totalorder %s370, 3
      %s372 = scalar_select %p371, %s370, 3
      %s373 = smul.addr %s372, 8
      %s374 = scalar_lea.vmem %s3, %s373
      %s375 = smul.u32 4, %s43
      %s376 = smul.u32 %s43, 32
      %p377 = scmp.eq.s32.totalorder %s42, 0
      %p378 = scmp.eq.s32.totalorder %s43, 0
      %p379 = pnand %p377, %p378
      %p380 = pneg %p379
      // Predicated region
      $region61: #{evidential_gnn_forward.1} parent=59 // pred_check
        _
      $region62: #{evidential_gnn_forward.1} parent=59 // pred_check_branch
        %382 = sbr.rel (%p379) target = $region64
      $region63: #{evidential_gnn_forward.1} parent=59 // pred_region
        %vm383 = vcmask 162816
        %384 = vst.msk [vmem:[#allocation2] sm:$0xff] %vm383, 0.0
        %385 = vst.msk [vmem:[#allocation2 + $0x8] sm:$0xff] %vm383, 0.0
        %386 = vst.msk [vmem:[#allocation2 + $0x10] sm:$0xff] %vm383, 0.0
        %387 = vst.msk [vmem:[#allocation3] sm:$0xff] %vm383, 0.0
        %388 = vst.msk [vmem:[#allocation3 + $0x8] sm:$0xff] %vm383, 0.0
        %389 = vst.msk [vmem:[#allocation3 + $0x10] sm:$0xff] %vm383, 0.0
      $region64: #{evidential_gnn_forward.1} parent=59 // pred_fallthru
        _
      // Predicated region
      $region65: #{evidential_gnn_forward.1} parent=59 // pred_check
        %p390 = pneg %p377
      $region66: #{evidential_gnn_forward.1} parent=59 // pred_check_branch
        %392 = sbr.rel (%p390) target = $region68
      $region67: #{evidential_gnn_forward.1} parent=59 // pred_region
        %vm393 = vcmask 162816
        %394 = vst.msk [vmem:[#allocation4] sm:$0xff] %vm393, 0.0
        %395 = vst.msk [vmem:[#allocation4 + $0x8] sm:$0xff] %vm393, 0.0
        %396 = vst.msk [vmem:[#allocation4 + $0x10] sm:$0xff] %vm393, 0.0
        %397 = vst.msk [vmem:[#allocation4 + $0x18] sm:$0xff] %vm393, 0.0
      $region68: #{evidential_gnn_forward.1} parent=59 // pred_fallthru
        _
      %p398 = scmp.gt.s32.totalorder %s42, 0
      // Predicated region
      $region69: #{evidential_gnn_forward.1} parent=59 // pred_check
        %p399 = pneg %p398
      $region70: #{evidential_gnn_forward.1} parent=59 // pred_check_branch
        %401 = sbr.rel (%p399) target = $region72
      $region71: #{evidential_gnn_forward.1} parent=59 // pred_region
        loop: start=0, step=1, limit=32
        $region73: #{evidential_gnn_forward.1} parent=71 // loop_pre_header
          _
        $region74: #{evidential_gnn_forward.1} parent=71 // loop_header
          %s403 = sphi 0, %s407
          %p404 = scmp.ge.s32.totalorder %s403, 32
        $region75: #{evidential_gnn_forward.1} parent=71 // loop_header_branch
          %406 = sbr.rel (%p404) target = $region79
        $region76: #{evidential_gnn_forward.1} parent=71 // loop_body
          %s408 = sadd.s32 %s376, %s403
          %s409 = sld [smem:[#allocation8 + %s408]]
          %s410 = scalar_lea.vmem [#allocation2], %s409
          %v411 = vld [vmem:[%s410] sm:$0x1]
          %s412 = scalar_lea.vmem [#allocation4], %s403
          %vm413 = vcmask 155648
          %414 = vst.msk [vmem:[%s412] sm:$0x1] %vm413, %v411
        $region77: #{evidential_gnn_forward.1} parent=71 // loop_footer
          %s407 = sadd.s32 1, %s403
        $region78: #{evidential_gnn_forward.1} parent=71 // loop_footer_branch
          %402 = sbr.rel target = $region74
        $region79: #{evidential_gnn_forward.1} parent=71 // loop_exit
          _
      $region72: #{evidential_gnn_forward.1} parent=59 // pred_fallthru
        _
      %v415 = vld [vmem:[#allocation4] sm:$0xff]
      %v416 = vld [vmem:[#allocation4 + $0x8] sm:$0xff]
      %v417 = vld [vmem:[#allocation4 + $0x10] sm:$0xff]
      %v418 = vld [vmem:[#allocation4 + $0x18] sm:$0xff]
      %v419 = vld [vmem:[%s4] sm:$0xff]
      %v420 = vld [vmem:[%s4 + $0x8] sm:$0xff]
      %v421 = vld [vmem:[%s4 + $0x10] sm:$0xf]
      %v422 = vld [vmem:[%s374] sm:$0xff]
      %v423 = vld [vmem:[%s374 + $0x8] sm:$0xff]
      %v424 = vld [vmem:[%s374 + $0x10] sm:$0xff]
      %v425 = vld [vmem:[%s374 + $0x18] sm:$0xff]
      %vm426 = vcmask 162816
      %v428 = vsel %vm426, %v415, 0
      %v431 = vsel %vm426, %v416, 0
      %v434 = vsel %vm426, %v417, 0
      %v437 = vsel %vm426, %v418, 0
      %vm439 = vcmask 1043456
      %v441 = vsel %vm439, %v421, 0
      %443 = vmatprep.subr.mxu0 0.0
      %444 = vmatpush1.msra.mxu0 0.0
      %445 = vmatprep.subr.mxu0 0.0
      %446 = vmatpush1.msra.mxu0 0.0
      %447 = vmatprep.subr.mxu0 0.0
      %448 = vmatpush1.msra.mxu0 0.0
      %449 = vmatprep.subr.mxu0 0.0
      %450 = vmatpush1.msra.mxu0 0.0
      %451 = vmatprep.subr.mxu0 0.0
      %452 = vmatpush1.msra.mxu0 0.0
      %453 = vmatprep.subr.mxu0 0.0
      %454 = vmatpush1.msra.mxu0 0.0
      %455 = vmatprep.subr.mxu0 0.0
      %456 = vmatpush1.msra.mxu0 0.0
      %457 = vmatprep.subr.mxu0 0.0
      %458 = vmatpush1.msra.mxu0 0.0
      %459 = vmatprep.subr.mxu0 0.0
      %460 = vmatpush1.msra.mxu0 0.0
      %461 = vmatprep.subr.mxu0 0.0
      %462 = vmatpush1.msra.mxu0 0.0
      %463 = vmatprep.subr.mxu0 0.0
      %464 = vmatpush1.msra.mxu0 0.0
      %465 = vmatprep.subr.mxu0 0.0
      %466 = vmatpush1.msra.mxu0 0.0
      %467 = vmatprep.subr.mxu0 0.0
      %468 = vmatpush1.msra.mxu0 0.0
      %469 = vmatprep.subr.mxu0 0.0
      %470 = vmatpush1.msra.mxu0 %v441
      %471 = vmatprep.subr.mxu0 0.0
      %472 = vmatpush1.msra.mxu0 %v420
      %473 = vmatprep.subr.mxu0 0.0
      %474 = vmatpush1.msra.mxu0 %v419
      %475 = vmatprep.subr.mxu0 0.0
      %476 = vmatpush2.msra.mxu0 0.0
      %477 = vmatprep.subr.mxu0 0.0
      %478 = vmatpush2.msra.mxu0 0.0
      %479 = vmatprep.subr.mxu0 0.0
      %480 = vmatpush2.msra.mxu0 0.0
      %481 = vmatprep.subr.mxu0 0.0
      %482 = vmatpush2.msra.mxu0 0.0
      %483 = vmatprep.subr.mxu0 0.0
      %484 = vmatpush2.msra.mxu0 0.0
      %485 = vmatprep.subr.mxu0 0.0
      %486 = vmatpush2.msra.mxu0 0.0
      %487 = vmatprep.subr.mxu0 0.0
      %488 = vmatpush2.msra.mxu0 0.0
      %489 = vmatprep.subr.mxu0 0.0
      %490 = vmatpush2.msra.mxu0 0.0
      %491 = vmatprep.subr.mxu0 0.0
      %492 = vmatpush2.msra.mxu0 0.0
      %493 = vmatprep.subr.mxu0 0.0
      %494 = vmatpush2.msra.mxu0 0.0
      %495 = vmatprep.subr.mxu0 0.0
      %496 = vmatpush2.msra.mxu0 0.0
      %497 = vmatprep.subr.mxu0 0.0
      %498 = vmatpush2.msra.mxu0 0.0
      %499 = vmatprep.subr.mxu0 0.0
      %500 = vmatpush2.msra.mxu0 0.0
      %501 = vmatprep.subr.mxu0 0.0
      %502 = vmatpush2.msra.mxu0 0.0
      %503 = vmatprep.subr.mxu0 0.0
      %504 = vmatpush2.msra.mxu0 0.0
      %505 = vmatprep.subr.mxu0 0.0
      %506 = vmatpush2.msra.mxu0 0.0
      %507 = vmatprep.mubr.f32.mxu0 0.0
      %508 = vmatmul.mubr.f32.gmra.mxu0 %v428
      %v509 = vpop.f32.mrf.mxu0
      %v510 = vadd.f32 %v422, %v509
      %v511 = vpop.f32.mrf.mxu0
      %512 = vmatprep.mubr.f32.mxu0 0.0
      %513 = vmatmul.mubr.f32.gmra.mxu0 %v431
      %v514 = vpop.f32.mrf.mxu0
      %v515 = vadd.f32 %v423, %v514
      %v516 = vpop.f32.mrf.mxu0
      %517 = vmatprep.mubr.f32.mxu0 0.0
      %518 = vmatmul.mubr.f32.gmra.mxu0 %v434
      %v519 = vpop.f32.mrf.mxu0
      %v520 = vadd.f32 %v424, %v519
      %v521 = vpop.f32.mrf.mxu0
      %522 = vmatprep.mubr.f32.mxu0 0.0
      %523 = vmatmul.mubr.f32.gmra.mxu0 %v437
      %v524 = vpop.f32.mrf.mxu0
      %v525 = vadd.f32 %v425, %v524
      %v526 = vpop.f32.mrf.mxu0
      %527 = vdwg.mxu0
      %v528 = vtanh.pop %v510
      %v529 = vtanh.pop %v515
      %v530 = vtanh.pop %v520
      %v531 = vtanh.pop %v525
      %v532 = vld [vmem:[%s5] sm:$0xff]
      %v533 = vld [vmem:[%s5 + $0x8] sm:$0xff]
      %v534 = vld [vmem:[%s5 + $0x10] sm:$0xff]
      %v535 = vld [vmem:[%s5 + $0x18] sm:$0xff]
      %v536 = vld [vmem:[%s5 + $0x20] sm:$0xff]
      %v537 = vld [vmem:[%s5 + $0x28] sm:$0xff]
      %v538 = vld [vmem:[%s5 + $0x30] sm:$0xff]
      %v539 = vld [vmem:[%s5 + $0x38] sm:$0xff]
      %v540 = vld [vmem:[%s5 + $0x40] sm:$0xff]
      %v541 = vld [vmem:[%s5 + $0x48] sm:$0xff]
      %v542 = vld [vmem:[%s6] sm:$0x3]
      %v544 = vlaneseq
      %v545 = vshrl.u32 %v544, 7
      %v546 = vsub.s32 0, %v545
      %v547 = vrot.slane %v542, %v546
      %v548 = vlaneseq
      %v549 = vshrl.u32 %v548, 7
      %v550 = vsub.s32 1, %v549
      %v551 = vrot.slane %v542, %v550
      %vm554 = vcmask 326656
      %v556 = vsel %vm554, %v528, 0
      %v559 = vsel %vm554, %v529, 0
      %v562 = vsel %vm554, %v530, 0
      %v565 = vsel %vm554, %v531, 0
      %567 = vmatprep.subr.mxu0 0.0
      %568 = vmatpush1.msra.mxu0 0.0
      %569 = vmatprep.subr.mxu0 0.0
      %570 = vmatpush1.msra.mxu0 0.0
      %571 = vmatprep.subr.mxu0 0.0
      %572 = vmatpush1.msra.mxu0 0.0
      %573 = vmatprep.subr.mxu0 0.0
      %574 = vmatpush1.msra.mxu0 0.0
      %575 = vmatprep.subr.mxu0 0.0
      %576 = vmatpush1.msra.mxu0 0.0
      %577 = vmatprep.subr.mxu0 0.0
      %578 = vmatpush1.msra.mxu0 0.0
      %579 = vmatprep.subr.mxu0 0.0
      %580 = vmatpush1.msra.mxu0 0.0
      %581 = vmatprep.subr.mxu0 0.0
      %582 = vmatpush1.msra.mxu0 0.0
      %583 = vmatprep.subr.mxu0 0.0
      %584 = vmatpush1.msra.mxu0 0.0
      %585 = vmatprep.subr.mxu0 0.0
      %586 = vmatpush1.msra.mxu0 0.0
      %587 = vmatprep.subr.mxu0 0.0
      %588 = vmatpush1.msra.mxu0 0.0
      %589 = vmatprep.subr.mxu0 %v541
      %590 = vmatpush1.msra.mxu0 %v540
      %591 = vmatprep.subr.mxu0 %v539
      %592 = vmatpush1.msra.mxu0 %v538
      %593 = vmatprep.subr.mxu0 %v537
      %594 = vmatpush1.msra.mxu0 %v536
      %595 = vmatprep.subr.mxu0 %v535
      %596 = vmatpush1.msra.mxu0 %v534
      %597 = vmatprep.subr.mxu0 %v533
      %598 = vmatpush1.msra.mxu0 %v532
      %599 = vmatprep.subr.mxu0 0.0
      %600 = vmatpush2.msra.mxu0 0.0
      %601 = vmatprep.subr.mxu0 0.0
      %602 = vmatpush2.msra.mxu0 0.0
      %603 = vmatprep.subr.mxu0 0.0
      %604 = vmatpush2.msra.mxu0 0.0
      %605 = vmatprep.subr.mxu0 0.0
      %606 = vmatpush2.msra.mxu0 0.0
      %607 = vmatprep.subr.mxu0 0.0
      %608 = vmatpush2.msra.mxu0 0.0
      %609 = vmatprep.subr.mxu0 0.0
      %610 = vmatpush2.msra.mxu0 0.0
      %611 = vmatprep.subr.mxu0 0.0
      %612 = vmatpush2.msra.mxu0 0.0
      %613 = vmatprep.subr.mxu0 0.0
      %614 = vmatpush2.msra.mxu0 0.0
      %615 = vmatprep.subr.mxu0 0.0
      %616 = vmatpush2.msra.mxu0 0.0
      %617 = vmatprep.subr.mxu0 0.0
      %618 = vmatpush2.msra.mxu0 0.0
      %619 = vmatprep.subr.mxu0 0.0
      %620 = vmatpush2.msra.mxu0 0.0
      %621 = vmatprep.subr.mxu0 0.0
      %622 = vmatpush2.msra.mxu0 0.0
      %623 = vmatprep.subr.mxu0 0.0
      %624 = vmatpush2.msra.mxu0 0.0
      %625 = vmatprep.subr.mxu0 0.0
      %626 = vmatpush2.msra.mxu0 0.0
      %627 = vmatprep.subr.mxu0 0.0
      %628 = vmatpush2.msra.mxu0 0.0
      %629 = vmatprep.subr.mxu0 0.0
      %630 = vmatpush2.msra.mxu0 0.0
      %631 = vmatprep.mubr.f32.mxu0 0.0
      %632 = vmatmul.mubr.f32.gmra.mxu0 %v556
      %v633 = vpop.f32.mrf.mxu0
      %v634 = vadd.f32 %v547, %v633
      %v635 = vpop.f32.mrf.mxu0
      %v636 = vadd.f32 %v551, %v635
      %637 = vmatprep.mubr.f32.mxu0 0.0
      %638 = vmatmul.mubr.f32.gmra.mxu0 %v559
      %v639 = vpop.f32.mrf.mxu0
      %v640 = vadd.f32 %v547, %v639
      %v641 = vpop.f32.mrf.mxu0
      %v642 = vadd.f32 %v551, %v641
      %643 = vmatprep.mubr.f32.mxu0 0.0
      %644 = vmatmul.mubr.f32.gmra.mxu0 %v562
      %v645 = vpop.f32.mrf.mxu0
      %v646 = vadd.f32 %v547, %v645
      %v647 = vpop.f32.mrf.mxu0
      %v648 = vadd.f32 %v551, %v647
      %649 = vmatprep.mubr.f32.mxu0 0.0
      %650 = vmatmul.mubr.f32.gmra.mxu0 %v565
      %v651 = vpop.f32.mrf.mxu0
      %v652 = vadd.f32 %v547, %v651
      %v653 = vpop.f32.mrf.mxu0
      %v654 = vadd.f32 %v551, %v653
      %655 = vdwg.mxu0
      %v656 = vtanh.pop %v634
      %v657 = vtanh.pop %v636
      %v658 = vtanh.pop %v640
      %v659 = vtanh.pop %v642
      %v660 = vtanh.pop %v646
      %v661 = vtanh.pop %v648
      %v662 = vtanh.pop %v652
      %v663 = vtanh.pop %v654
      %v664 = vld [vmem:[%s7] sm:$0xff]
      %v665 = vld [vmem:[%s7 + $0x8] sm:$0xff]
      %v666 = vld [vmem:[%s7 + $0x10] sm:$0xff]
      %v667 = vld [vmem:[%s7 + $0x18] sm:$0xff]
      %v668 = vld [vmem:[%s7 + $0x20] sm:$0xff]
      %v669 = vld [vmem:[%s7 + $0x28] sm:$0xff]
      %v670 = vld [vmem:[%s7 + $0x30] sm:$0xff]
      %v671 = vld [vmem:[%s7 + $0x38] sm:$0xff]
      %v672 = vld [vmem:[%s7 + $0x40] sm:$0xff]
      %v673 = vld [vmem:[%s7 + $0x48] sm:$0xff]
      %v674 = vld [vmem:[%s7 + $0x50] sm:$0xff]
      %v675 = vld [vmem:[%s7 + $0x58] sm:$0xff]
      %v676 = vld [vmem:[%s7 + $0x60] sm:$0xff]
      %v677 = vld [vmem:[%s7 + $0x68] sm:$0xff]
      %v678 = vld [vmem:[%s7 + $0x70] sm:$0xff]
      %v679 = vld [vmem:[%s7 + $0x78] sm:$0xff]
      %v680 = vld [vmem:[%s7 + $0x80] sm:$0xff]
      %v681 = vld [vmem:[%s7 + $0x88] sm:$0xff]
      %v682 = vld [vmem:[%s7 + $0x90] sm:$0xff]
      %v683 = vld [vmem:[%s7 + $0x98] sm:$0xff]
      %v684 = vld [vmem:[%s7 + $0xa0] sm:$0xff]
      %v685 = vld [vmem:[%s7 + $0xa8] sm:$0xff]
      %v686 = vld [vmem:[%s7 + $0xb0] sm:$0xff]
      %v687 = vld [vmem:[%s7 + $0xb8] sm:$0xff]
      %v688 = vld [vmem:[%s7 + $0xc0] sm:$0xff]
      %v689 = vld [vmem:[%s7 + $0xc8] sm:$0xff]
      %v690 = vld [vmem:[%s7 + $0xd0] sm:$0xff]
      %v691 = vld [vmem:[%s7 + $0xd8] sm:$0xff]
      %v692 = vld [vmem:[%s7 + $0xe0] sm:$0xff]
      %v693 = vld [vmem:[%s7 + $0xe8] sm:$0xff]
      %v694 = vld [vmem:[%s7 + $0xf0] sm:$0xff]
      %v695 = vld [vmem:[%s7 + $0xf8] sm:$0xff]
      %v696 = vld [vmem:[%s8] sm:$0x1]
      %v698 = vlaneseq
      %v699 = vshrl.u32 %v698, 7
      %v700 = vsub.s32 0, %v699
      %v701 = vrot.slane %v696, %v700
      %703 = vmatprep.subr.mxu0 0.0
      %704 = vmatpush1.msra.mxu0 %v679
      %705 = vmatprep.subr.mxu0 0.0
      %706 = vmatpush1.msra.mxu0 %v678
      %707 = vmatprep.subr.mxu0 0.0
      %708 = vmatpush1.msra.mxu0 %v677
      %709 = vmatprep.subr.mxu0 0.0
      %710 = vmatpush1.msra.mxu0 %v676
      %711 = vmatprep.subr.mxu0 0.0
      %712 = vmatpush1.msra.mxu0 %v675
      %713 = vmatprep.subr.mxu0 0.0
      %714 = vmatpush1.msra.mxu0 %v674
      %715 = vmatprep.subr.mxu0 0.0
      %716 = vmatpush1.msra.mxu0 %v673
      %717 = vmatprep.subr.mxu0 0.0
      %718 = vmatpush1.msra.mxu0 %v672
      %719 = vmatprep.subr.mxu0 0.0
      %720 = vmatpush1.msra.mxu0 %v671
      %721 = vmatprep.subr.mxu0 0.0
      %722 = vmatpush1.msra.mxu0 %v670
      %723 = vmatprep.subr.mxu0 0.0
      %724 = vmatpush1.msra.mxu0 %v669
      %725 = vmatprep.subr.mxu0 0.0
      %726 = vmatpush1.msra.mxu0 %v668
      %727 = vmatprep.subr.mxu0 0.0
      %728 = vmatpush1.msra.mxu0 %v667
      %729 = vmatprep.subr.mxu0 0.0
      %730 = vmatpush1.msra.mxu0 %v666
      %731 = vmatprep.subr.mxu0 0.0
      %732 = vmatpush1.msra.mxu0 %v665
      %733 = vmatprep.subr.mxu0 0.0
      %734 = vmatpush1.msra.mxu0 %v664
      %735 = vmatprep.subr.mxu0 0.0
      %736 = vmatpush2.msra.mxu0 %v695
      %737 = vmatprep.subr.mxu0 0.0
      %738 = vmatpush2.msra.mxu0 %v694
      %739 = vmatprep.subr.mxu0 0.0
      %740 = vmatpush2.msra.mxu0 %v693
      %741 = vmatprep.subr.mxu0 0.0
      %742 = vmatpush2.msra.mxu0 %v692
      %743 = vmatprep.subr.mxu0 0.0
      %744 = vmatpush2.msra.mxu0 %v691
      %745 = vmatprep.subr.mxu0 0.0
      %746 = vmatpush2.msra.mxu0 %v690
      %747 = vmatprep.subr.mxu0 0.0
      %748 = vmatpush2.msra.mxu0 %v689
      %749 = vmatprep.subr.mxu0 0.0
      %750 = vmatpush2.msra.mxu0 %v688
      %751 = vmatprep.subr.mxu0 0.0
      %752 = vmatpush2.msra.mxu0 %v687
      %753 = vmatprep.subr.mxu0 0.0
      %754 = vmatpush2.msra.mxu0 %v686
      %755 = vmatprep.subr.mxu0 0.0
      %756 = vmatpush2.msra.mxu0 %v685
      %757 = vmatprep.subr.mxu0 0.0
      %758 = vmatpush2.msra.mxu0 %v684
      %759 = vmatprep.subr.mxu0 0.0
      %760 = vmatpush2.msra.mxu0 %v683
      %761 = vmatprep.subr.mxu0 0.0
      %762 = vmatpush2.msra.mxu0 %v682
      %763 = vmatprep.subr.mxu0 0.0
      %764 = vmatpush2.msra.mxu0 %v681
      %765 = vmatprep.subr.mxu0 0.0
      %766 = vmatpush2.msra.mxu0 %v680
      %767 = vmatprep.mubr.f32.mxu0 %v657
      %768 = vmatmul.mubr.f32.gmra.mxu0 %v656
      %v769 = vpop.f32.mrf.mxu0
      %v770 = vadd.f32 %v701, %v769
      %v771 = vpop.f32.mrf.mxu0
      %772 = vmatprep.mubr.f32.mxu0 %v659
      %773 = vmatmul.mubr.f32.gmra.mxu0 %v658
      %v774 = vpop.f32.mrf.mxu0
      %v775 = vadd.f32 %v701, %v774
      %v776 = vpop.f32.mrf.mxu0
      %777 = vmatprep.mubr.f32.mxu0 %v661
      %778 = vmatmul.mubr.f32.gmra.mxu0 %v660
      %v779 = vpop.f32.mrf.mxu0
      %v780 = vadd.f32 %v701, %v779
      %v781 = vpop.f32.mrf.mxu0
      %782 = vmatprep.mubr.f32.mxu0 %v663
      %783 = vmatmul.mubr.f32.gmra.mxu0 %v662
      %v784 = vpop.f32.mrf.mxu0
      %v785 = vadd.f32 %v701, %v784
      %v786 = vpop.f32.mrf.mxu0
      %787 = vdwg.mxu0
      %v788 = vtanh.pop %v770
      %v789 = vtanh.pop %v775
      %v790 = vtanh.pop %v780
      %v791 = vtanh.pop %v785
      %v792 = vld [vmem:[%s9] sm:$0xff]
      %v793 = vld [vmem:[%s9 + $0x8] sm:$0xff]
      %v794 = vld [vmem:[%s9 + $0x10] sm:$0xff]
      %v795 = vld [vmem:[%s9 + $0x18] sm:$0xff]
      %v796 = vld [vmem:[%s9 + $0x20] sm:$0xff]
      %v797 = vld [vmem:[%s10] sm:$0x1]
      %v799 = vlaneseq
      %v800 = vshrl.u32 %v799, 7
      %v801 = vsub.s32 0, %v800
      %v802 = vrot.slane %v797, %v801
      %v805 = vsel %vm554, %v788, 0
      %v808 = vsel %vm554, %v789, 0
      %v811 = vsel %vm554, %v790, 0
      %v814 = vsel %vm554, %v791, 0
      %816 = vmatprep.subr.mxu0 0.0
      %817 = vmatpush1.msra.mxu0 0.0
      %818 = vmatprep.subr.mxu0 0.0
      %819 = vmatpush1.msra.mxu0 0.0
      %820 = vmatprep.subr.mxu0 0.0
      %821 = vmatpush1.msra.mxu0 0.0
      %822 = vmatprep.subr.mxu0 0.0
      %823 = vmatpush1.msra.mxu0 0.0
      %824 = vmatprep.subr.mxu0 0.0
      %825 = vmatpush1.msra.mxu0 0.0
      %826 = vmatprep.subr.mxu0 0.0
      %827 = vmatpush1.msra.mxu0 0.0
      %828 = vmatprep.subr.mxu0 0.0
      %829 = vmatpush1.msra.mxu0 0.0
      %830 = vmatprep.subr.mxu0 0.0
      %831 = vmatpush1.msra.mxu0 0.0
      %832 = vmatprep.subr.mxu0 0.0
      %833 = vmatpush1.msra.mxu0 0.0
      %834 = vmatprep.subr.mxu0 0.0
      %835 = vmatpush1.msra.mxu0 0.0
      %836 = vmatprep.subr.mxu0 0.0
      %837 = vmatpush1.msra.mxu0 0.0
      %838 = vmatprep.subr.mxu0 0.0
      %839 = vmatpush1.msra.mxu0 %v796
      %840 = vmatprep.subr.mxu0 0.0
      %841 = vmatpush1.msra.mxu0 %v795
      %842 = vmatprep.subr.mxu0 0.0
      %843 = vmatpush1.msra.mxu0 %v794
      %844 = vmatprep.subr.mxu0 0.0
      %845 = vmatpush1.msra.mxu0 %v793
      %846 = vmatprep.subr.mxu0 0.0
      %847 = vmatpush1.msra.mxu0 %v792
      %848 = vmatprep.subr.mxu0 0.0
      %849 = vmatpush2.msra.mxu0 0.0
      %850 = vmatprep.subr.mxu0 0.0
      %851 = vmatpush2.msra.mxu0 0.0
      %852 = vmatprep.subr.mxu0 0.0
      %853 = vmatpush2.msra.mxu0 0.0
      %854 = vmatprep.subr.mxu0 0.0
      %855 = vmatpush2.msra.mxu0 0.0
      %856 = vmatprep.subr.mxu0 0.0
      %857 = vmatpush2.msra.mxu0 0.0
      %858 = vmatprep.subr.mxu0 0.0
      %859 = vmatpush2.msra.mxu0 0.0
      %860 = vmatprep.subr.mxu0 0.0
      %861 = vmatpush2.msra.mxu0 0.0
      %862 = vmatprep.subr.mxu0 0.0
      %863 = vmatpush2.msra.mxu0 0.0
      %864 = vmatprep.subr.mxu0 0.0
      %865 = vmatpush2.msra.mxu0 0.0
      %866 = vmatprep.subr.mxu0 0.0
      %867 = vmatpush2.msra.mxu0 0.0
      %868 = vmatprep.subr.mxu0 0.0
      %869 = vmatpush2.msra.mxu0 0.0
      %870 = vmatprep.subr.mxu0 0.0
      %871 = vmatpush2.msra.mxu0 0.0
      %872 = vmatprep.subr.mxu0 0.0
      %873 = vmatpush2.msra.mxu0 0.0
      %874 = vmatprep.subr.mxu0 0.0
      %875 = vmatpush2.msra.mxu0 0.0
      %876 = vmatprep.subr.mxu0 0.0
      %877 = vmatpush2.msra.mxu0 0.0
      %878 = vmatprep.subr.mxu0 0.0
      %879 = vmatpush2.msra.mxu0 0.0
      %880 = vmatprep.mubr.f32.mxu0 0.0
      %881 = vmatmul.mubr.f32.gmra.mxu0 %v805
      %v882 = vpop.f32.mrf.mxu0
      %v883 = vadd.f32 %v802, %v882
      %v884 = vpop.f32.mrf.mxu0
      %885 = vmatprep.mubr.f32.mxu0 0.0
      %886 = vmatmul.mubr.f32.gmra.mxu0 %v808
      %v887 = vpop.f32.mrf.mxu0
      %v888 = vadd.f32 %v802, %v887
      %v889 = vpop.f32.mrf.mxu0
      %890 = vmatprep.mubr.f32.mxu0 0.0
      %891 = vmatmul.mubr.f32.gmra.mxu0 %v811
      %v892 = vpop.f32.mrf.mxu0
      %v893 = vadd.f32 %v802, %v892
      %v894 = vpop.f32.mrf.mxu0
      %895 = vmatprep.mubr.f32.mxu0 0.0
      %896 = vmatmul.mubr.f32.gmra.mxu0 %v814
      %v897 = vpop.f32.mrf.mxu0
      %v898 = vadd.f32 %v802, %v897
      %v899 = vpop.f32.mrf.mxu0
      %900 = vdwg.mxu0
      %v901 = vtanh.pop %v883
      %v902 = vtanh.pop %v888
      %v903 = vtanh.pop %v893
      %v904 = vtanh.pop %v898
      %905 = vst.msk [vmem:[#allocation5] sm:$0xff] %vm426, %v901
      %906 = vst.msk [vmem:[#allocation5 + $0x8] sm:$0xff] %vm426, %v902
      %907 = vst.msk [vmem:[#allocation5 + $0x10] sm:$0xff] %vm426, %v903
      %908 = vst.msk [vmem:[#allocation5 + $0x18] sm:$0xff] %vm426, %v904
      loop: start=0, step=1, limit=32
      $region80: #{evidential_gnn_forward.1} parent=59 // loop_pre_header
        _
      $region81: #{evidential_gnn_forward.1} parent=59 // loop_header
        %s910 = sphi 0, %s914
        %p911 = scmp.ge.s32.totalorder %s910, 32
      $region82: #{evidential_gnn_forward.1} parent=59 // loop_header_branch
        %913 = sbr.rel (%p911) target = $region86
      $region83: #{evidential_gnn_forward.1} parent=59 // loop_body
        %s915 = sadd.s32 %s376, %s910
        %s916 = sld [smem:[#allocation9 + %s915]]
        %s917 = scalar_lea.vmem [#allocation3], %s916
        %v918 = vld [vmem:[%s917] sm:$0x1]
        %s919 = scalar_lea.vmem [#allocation5], %s910
        %v920 = vld [vmem:[%s919] sm:$0x1]
        %v921 = vadd.f32 %v918, %v920
        %vm922 = vcmask 155648
        %923 = vst.msk [vmem:[%s917] sm:$0x1] %vm922, %v921
      $region84: #{evidential_gnn_forward.1} parent=59 // loop_footer
        %s914 = sadd.s32 1, %s910
      $region85: #{evidential_gnn_forward.1} parent=59 // loop_footer_branch
        %909 = sbr.rel target = $region81
      $region86: #{evidential_gnn_forward.1} parent=59 // loop_exit
        _
      // Predicated region
      $region87: #{evidential_gnn_forward.1} parent=59 // pred_check
        %p924 = pneg %p378
      $region88: #{evidential_gnn_forward.1} parent=59 // pred_check_branch
        %926 = sbr.rel (%p924) target = $region90
      $region89: #{evidential_gnn_forward.1} parent=59 // pred_region
        %v927 = vld [vmem:[#allocation3] sm:$0xff]
        %v928 = vld [vmem:[#allocation3 + $0x8] sm:$0xff]
        %v929 = vld [vmem:[#allocation3 + $0x10] sm:$0xff]
        %930 = vst.msk [vmem:[#allocation2] sm:$0xff] %vm426, %v927
        %931 = vst.msk [vmem:[#allocation2 + $0x8] sm:$0xff] %vm426, %v928
        %932 = vst.msk [vmem:[#allocation2 + $0x10] sm:$0xff] %vm426, %v929
      $region90: #{evidential_gnn_forward.1} parent=59 // pred_fallthru
        _
      %p933 = scmp.eq.s32.totalorder %s42, 2
      %p934 = pnand %p933, %p378
      %p935 = pneg %p934
      // Predicated region
      $region91: #{evidential_gnn_forward.1} parent=59 // pred_check
        _
      $region92: #{evidential_gnn_forward.1} parent=59 // pred_check_branch
        %937 = sbr.rel (%p934) target = $region94
      $region93: #{evidential_gnn_forward.1} parent=59 // pred_region
        %938 = vst.msk [vmem:[#allocation6] sm:$0xff] %vm426, 0.0
        loop: start=0, step=1, limit=16
        $region95: #{evidential_gnn_forward.1} parent=93 // loop_pre_header
          _
        $region96: #{evidential_gnn_forward.1} parent=93 // loop_header
          %s940 = sphi 0, %s944
          %p941 = scmp.ge.s32.totalorder %s940, 16
        $region97: #{evidential_gnn_forward.1} parent=93 // loop_header_branch
          %943 = sbr.rel (%p941) target = $region101
        $region98: #{evidential_gnn_forward.1} parent=93 // loop_body
          %s945 = sld [smem:[#allocation10 + %s940]]
          %s946 = scalar_lea.vmem [#allocation6], %s945
          %v947 = vld [vmem:[%s946] sm:$0x1]
          %s948 = scalar_lea.vmem [#allocation3], %s940
          %v949 = vld [vmem:[%s948] sm:$0x1]
          %v950 = vadd.f32 %v947, %v949
          %vm951 = vcmask 155648
          %952 = vst.msk [vmem:[%s946] sm:$0x1] %vm951, %v950
        $region99: #{evidential_gnn_forward.1} parent=93 // loop_footer
          %s944 = sadd.s32 1, %s940
        $region100: #{evidential_gnn_forward.1} parent=93 // loop_footer_branch
          %939 = sbr.rel target = $region96
        $region101: #{evidential_gnn_forward.1} parent=93 // loop_exit
          _
        %v953 = vld [vmem:[#allocation6] sm:$0xff]
        %v954 = vld [vmem:[%s11] sm:$0xff]
        %v955 = vld [vmem:[%s11 + $0x8] sm:$0xff]
        %v956 = vld [vmem:[%s11 + $0x10] sm:$0xf]
        %v957 = vld [vmem:[%s12] sm:$0x1]
        %v959 = vlaneseq
        %v960 = vshrl.u32 %v959, 7
        %v961 = vsub.s32 0, %v960
        %v962 = vrot.slane %v957, %v961
        %v965 = vsel %vm426, %v953, 0
        %v968 = vsel %vm439, %v956, 0
        %970 = vmatprep.subr.mxu0 0.0
        %971 = vmatpush1.msra.mxu0 0.0
        %972 = vmatprep.subr.mxu0 0.0
        %973 = vmatpush1.msra.mxu0 0.0
        %974 = vmatprep.subr.mxu0 0.0
        %975 = vmatpush1.msra.mxu0 0.0
        %976 = vmatprep.subr.mxu0 0.0
        %977 = vmatpush1.msra.mxu0 0.0
        %978 = vmatprep.subr.mxu0 0.0
        %979 = vmatpush1.msra.mxu0 0.0
        %980 = vmatprep.subr.mxu0 0.0
        %981 = vmatpush1.msra.mxu0 0.0
        %982 = vmatprep.subr.mxu0 0.0
        %983 = vmatpush1.msra.mxu0 0.0
        %984 = vmatprep.subr.mxu0 0.0
        %985 = vmatpush1.msra.mxu0 0.0
        %986 = vmatprep.subr.mxu0 0.0
        %987 = vmatpush1.msra.mxu0 0.0
        %988 = vmatprep.subr.mxu0 0.0
        %989 = vmatpush1.msra.mxu0 0.0
        %990 = vmatprep.subr.mxu0 0.0
        %991 = vmatpush1.msra.mxu0 0.0
        %992 = vmatprep.subr.mxu0 0.0
        %993 = vmatpush1.msra.mxu0 0.0
        %994 = vmatprep.subr.mxu0 0.0
        %995 = vmatpush1.msra.mxu0 0.0
        %996 = vmatprep.subr.mxu0 0.0
        %997 = vmatpush1.msra.mxu0 %v968
        %998 = vmatprep.subr.mxu0 0.0
        %999 = vmatpush1.msra.mxu0 %v955
        %1000 = vmatprep.subr.mxu0 0.0
        %1001 = vmatpush1.msra.mxu0 %v954
        %1002 = vmatprep.subr.mxu0 0.0
        %1003 = vmatpush2.msra.mxu0 0.0
        %1004 = vmatprep.subr.mxu0 0.0
        %1005 = vmatpush2.msra.mxu0 0.0
        %1006 = vmatprep.subr.mxu0 0.0
        %1007 = vmatpush2.msra.mxu0 0.0
        %1008 = vmatprep.subr.mxu0 0.0
        %1009 = vmatpush2.msra.mxu0 0.0
        %1010 = vmatprep.subr.mxu0 0.0
        %1011 = vmatpush2.msra.mxu0 0.0
        %1012 = vmatprep.subr.mxu0 0.0
        %1013 = vmatpush2.msra.mxu0 0.0
        %1014 = vmatprep.subr.mxu0 0.0
        %1015 = vmatpush2.msra.mxu0 0.0
        %1016 = vmatprep.subr.mxu0 0.0
        %1017 = vmatpush2.msra.mxu0 0.0
        %1018 = vmatprep.subr.mxu0 0.0
        %1019 = vmatpush2.msra.mxu0 0.0
        %1020 = vmatprep.subr.mxu0 0.0
        %1021 = vmatpush2.msra.mxu0 0.0
        %1022 = vmatprep.subr.mxu0 0.0
        %1023 = vmatpush2.msra.mxu0 0.0
        %1024 = vmatprep.subr.mxu0 0.0
        %1025 = vmatpush2.msra.mxu0 0.0
        %1026 = vmatprep.subr.mxu0 0.0
        %1027 = vmatpush2.msra.mxu0 0.0
        %1028 = vmatprep.subr.mxu0 0.0
        %1029 = vmatpush2.msra.mxu0 0.0
        %1030 = vmatprep.subr.mxu0 0.0
        %1031 = vmatpush2.msra.mxu0 0.0
        %1032 = vmatprep.subr.mxu0 0.0
        %1033 = vmatpush2.msra.mxu0 0.0
        %1034 = vmatprep.mubr.f32.mxu0 0.0
        %1035 = vmatmul.mubr.f32.gmra.mxu0 %v965
        %v1036 = vpop.f32.mrf.mxu0
        %v1037 = vadd.f32 %v962, %v1036
        %v1038 = vpop.f32.mrf.mxu0
        %1039 = vdwg.mxu0
        %v1040 = vand.u32 2147483647, %v1037
        %v1041 = vsub.f32 0.0, %v1040
        %v1042 = vmul.f32 %v1041, 1.442695
        %v1043 = vpow.pop %v1042
        %v1044 = vadd.f32 %v1043, 1.0
        %v1045 = vlog2.pop %v1044
        %v1046 = vmul.f32 %v1045, 0.6931472
        %v1047 = vmul.f32 -0.5, %v1043
        %v1048 = vadd.f32 %v1047, 1.0
        %v1049 = vmul.f32 %v1048, %v1043
        %v1050 = vand.u32 2147483647, %v1043
        %vm1051 = vcmp.lt.f32.partialorder %v1050, 0.0004427343
        %v1052 = vsel %vm1051, %v1049, %v1046
        %v1053 = vmax.f32 %v1037, 0.0
        %v1054 = vadd.f32 %v1052, %v1053
        %v1055 = vlaneseq
        %v1056 = vand.u32 %v1055, 127
        %vm1057 = vcmp.eq.s32.totalorder %v1056, 0
        %vm1058 = vcmp.eq.s32.totalorder %v1056, 2
        %v1059 = vadd.f32 %v1054, 1.0
        %v1060 = vadd.f32 %v1059, 1e-05
        %v1061 = vadd.f32 %v1054, 1e-05
        %v1062 = vsel %vm1058, %v1060, %v1061
        %v1063 = vsel %vm1057, %v1037, %v1062
        %vm1064 = vcmask 31744
        %1065 = vst.msk [vmem:[%s13] sm:$0xff] %vm1064, %v1063
      $region94: #{evidential_gnn_forward.1} parent=59 // pred_fallthru
        _
      // Predicated region
      $region102: #{evidential_gnn_forward.1} parent=59 // pred_check
        %p1066 = pneg %p278
      $region103: #{evidential_gnn_forward.1} parent=59 // pred_check_branch
        %1068 = sbr.rel (%p1066) target = $region105
      $region104: #{evidential_gnn_forward.1} parent=59 // pred_region
        _
      $region105: #{evidential_gnn_forward.1} parent=59 // pred_fallthru
        _
      // Predicated region
      $region106: #{evidential_gnn_forward.1} parent=59 // pred_check
        %p1069 = pneg %p278
      $region107: #{evidential_gnn_forward.1} parent=59 // pred_check_branch
        %1071 = sbr.rel (%p1069) target = $region109
      $region108: #{evidential_gnn_forward.1} parent=59 // pred_region
        _
      $region109: #{evidential_gnn_forward.1} parent=59 // pred_fallthru
        _
    $region60: #{evidential_gnn_forward.1} parent=5 // pred_fallthru
      _
    %p1072 = scmp.le.s32.totalorder 2, %s33
    // Predicated region
    $region110: #{evidential_gnn_forward.1} parent=5 // pred_check
      %p1073 = pneg %p1072
    $region111: #{evidential_gnn_forward.1} parent=5 // pred_check_branch
      %1075 = sbr.rel (%p1073) target = $region113
    $region112: #{evidential_gnn_forward.1} parent=5 // pred_region
      %s1076 = ssub.s32 %s33, 2
    $region113: #{evidential_gnn_forward.1} parent=5 // pred_fallthru
      _
  $region6: #{evidential_gnn_forward.1} parent=0 // loop_footer
    %s37 = sadd.s32 1, %s33
  $region7: #{evidential_gnn_forward.1} parent=0 // loop_footer_branch
    %32 = sbr.rel target = $region3
  $region8: #{evidential_gnn_forward.1} parent=0 // loop_exit
    _

</llo_original>
